<compile_context>
chip_gen: v7x
topology: tpu7x:2x2x1
jax: 0.10.0
libtpu: 0.0.40
codegen_flags: <defaults>
</compile_context>

<pallas_src>
import math
import numpy as np
import jax
import jax.numpy as jnp
from jax.experimental import pallas as pl
from jax.experimental.pallas import tpu as pltpu


def _round_up(a, b):
    return (a + b - 1) // b * b


# ----------------------------------------------------------------------------
# Glue: linear (degree=1) B-spline basis, matching torch_spline_conv semantics.
# ----------------------------------------------------------------------------
def spline_basis_linear(pseudo, kernel_size, is_open_spline):
    """pseudo: [E, dim] in [0,1].  Returns basis [E, S], weight_index [E, S]."""
    E, dim = pseudo.shape
    S = 2 ** dim  # (degree+1)**dim with degree=1
    ks_f = kernel_size.astype(jnp.float32)
    v = pseudo * (ks_f - is_open_spline.astype(jnp.float32))[None, :]      # [E, dim]
    v_floor = jnp.floor(v)
    frac = v - v_floor                                                      # [E, dim]

    s_idx = jnp.arange(S)
    k_mod = (s_idx[:, None] // (2 ** jnp.arange(dim))[None, :]) % 2         # [S, dim]

    b = jnp.where(k_mod[None, :, :] == 1,
                  frac[:, None, :], 1.0 - frac[:, None, :])                 # [E, S, dim]
    basis = jnp.prod(b, axis=-1)                                            # [E, S]

    wi_d = (v_floor.astype(jnp.int32)[:, None, :] + k_mod[None, :, :]) \
        % kernel_size[None, None, :]                                        # [E, S, dim]
    offs = jnp.concatenate(
        [jnp.array([1], jnp.int32),
         jnp.cumprod(kernel_size)[:-1].astype(jnp.int32)])                  # [dim]
    weight_index = jnp.sum(wi_d * offs[None, None, :], axis=-1)             # [E, S]
    return basis, weight_index


# ----------------------------------------------------------------------------
# Pallas kernel: fused spline message matmul + on-the-fly one-hot scatter
# (accumulated in the resident output block), epilogue with deg-norm/root/bias.
# ----------------------------------------------------------------------------
def _spline_conv_kernel(xcol_ref, bfull_ref, row_ref, wflat_ref, rexp_ref,
                        texp_ref, x_ref, deginv_ref, root_ref, bias_ref,
                        out_ref):
    e_step = pl.program_id(1)
    tn = out_ref.shape[0]
    te = row_ref.shape[1]

    @pl.when(e_step == 0)
    def _init():
        out_ref[...] = jnp.zeros_like(out_ref)

    # Expand bfull [TE,K] and x_col [TE,Cin] to [TE, K*Cin] via constant
    # one-hot expansion matrices (both VMEM-resident, bf16):
    #   bexp[e, k*Cin+c] = bfull[e, k]      xexp[e, k*Cin+c] = x_col[e, c]
    bexp = jnp.dot(bfull_ref[...], rexp_ref[...],
                   preferred_element_type=jnp.float32)
    xexp = jnp.dot(xcol_ref[...], texp_ref[...],
                   preferred_element_type=jnp.float32)
    scaled = (bexp * xexp).astype(jnp.bfloat16)            # f32 VPU mul, bf16 for MXU

    # One fused MXU matmul instead of K small ones: [TE, K*Cin] @ [K*Cin, Coutp]
    msg = jnp.dot(scaled, wflat_ref[...],
                  preferred_element_type=jnp.float32)       # [TE, Coutp]

    # Destination one-hot built in-register from row indices (no [N,E] in HBM).
    n0 = pl.program_id(0) * tn
    node_ids = n0 + jax.lax.broadcasted_iota(jnp.int32, (tn, te), 0)
    onehot = (node_ids == row_ref[...]).astype(jnp.bfloat16)   # [TN, TE]

    # Scatter-add over destination nodes as a matmul into the resident output.
    out_ref[...] += jnp.dot(onehot, msg.astype(jnp.bfloat16),
                            preferred_element_type=jnp.float32)

    @pl.when(e_step == pl.num_programs(1) - 1)
    def _finalize():
        acc = out_ref[...] * deginv_ref[...]                   # norm (mul by 1/deg)
        acc = acc + jnp.dot(x_ref[...], root_ref[...],
                            preferred_element_type=jnp.float32)
        out_ref[...] = acc + bias_ref[...]


def spline_sample_forward(x, edge_index, pseudo, weight, root, bias,
                          kernel_size, is_open_spline, *,
                          tn_max=256, te_max=512):
    N, Cin = x.shape
    K, _, Cout = weight.shape
    row, col = edge_index[0].astype(jnp.int32), edge_index[1].astype(jnp.int32)
    E = int(row.shape[0])

    if E == 0:  # matches the module's empty-edge fast path
        return x @ root + bias

    # TODO(synk): sample_rate (random edge subsampling) is host-side glue in
    #             the original module and is not implemented here.

    # ---- cheap wrapper glue (basis, gather, degree) --------------------------
    basis, wi = spline_basis_linear(pseudo, kernel_size, is_open_spline)
    bfull = jnp.sum(basis[:, :, None] *
                    jax.nn.one_hot(wi, K, dtype=jnp.float32), axis=1)       # [E, K]

    deg = jnp.zeros((N,), jnp.float32).at[row].add(1.0)
    deg_inv = 1.0 / jnp.maximum(deg, 1.0)                                   # exact, f32

    # ---- tiling / padding (lane-dense output, (8,128)-aligned tiles) ---------
    Coutp = _round_up(Cout, 128)
    TN = min(tn_max, _round_up(N, 8))
    N_pad = _round_up(N, TN)
    TE = min(te_max, _round_up(E, 128))
    E_pad = _round_up(E, TE)
    KC = K * Cin

    x_bf = x.astype(jnp.bfloat16)
    x_col = jnp.pad(jnp.take(x_bf, col, axis=0), ((0, E_pad - E), (0, 0)))  # [E_pad, Cin]
    bfull_p = jnp.pad(bfull, ((0, E_pad - E), (0, 0))).astype(jnp.bfloat16)  # [E_pad, K]
    row_p = jnp.pad(row, (0, E_pad - E), constant_values=-1).reshape(1, E_pad)

    x_p = jnp.pad(x_bf, ((0, N_pad - N), (0, 0)))                            # [N_pad, Cin]
    deg_inv_p = jnp.pad(deg_inv, (0, N_pad - N),
                        constant_values=1.0).reshape(N_pad, 1)

    w_flat = jnp.pad(weight.reshape(KC, Cout).astype(jnp.bfloat16),
                     ((0, 0), (0, Coutp - Cout)))                            # [KC, Coutp]
    root_p = jnp.pad(root.astype(jnp.bfloat16), ((0, 0), (0, Coutp - Cout)))
    bias_p = jnp.pad(bias.astype(jnp.float32), (0, Coutp - Cout)).reshape(1, Coutp)

    # constant one-hot expansion matrices (VMEM-resident, bf16; 0/1 exact)
    j = jnp.arange(KC)
    rexp = (j[None, :] // Cin == jnp.arange(K)[:, None]).astype(jnp.bfloat16)   # [K, KC]
    texp = (j[None, :] % Cin == jnp.arange(Cin)[:, None]).astype(jnp.bfloat16)  # [Cin, KC]

    grid = (N_pad // TN, E_pad // TE)

    out = pl.pallas_call(
        _spline_conv_kernel,
        out_shape=jax.ShapeDtypeStruct((N_pad, Coutp), jnp.float32),
        grid=grid,
        in_specs=[
            pl.BlockSpec((TE, Cin), lambda n, e: (e, 0)),    # x_col    (edge stream)
            pl.BlockSpec((TE, K), lambda n, e: (e, 0)),      # bfull    (edge stream)
            pl.BlockSpec((1, TE), lambda n, e: (0, e)),      # row idx  (edge stream)
            pl.BlockSpec((KC, Coutp), lambda n, e: (0, 0)),  # fused weight (resident)
            pl.BlockSpec((K, KC), lambda n, e: (0, 0)),      # bfull expander (resident)
            pl.BlockSpec((Cin, KC), lambda n, e: (0, 0)),    # x_col expander (resident)
            pl.BlockSpec((TN, Cin), lambda n, e: (n, 0)),    # x       (node tile)
            pl.BlockSpec((TN, 1), lambda n, e: (n, 0)),      # 1/deg   (node tile)
            pl.BlockSpec((Cin, Coutp), lambda n, e: (0, 0)),  # root   (resident)
            pl.BlockSpec((1, Coutp), lambda n, e: (0, 0)),    # bias   (resident)
        ],
        out_specs=pl.BlockSpec((TN, Coutp), lambda n, e: (n, 0)),
        compiler_params=pltpu.CompilerParams(
            dimension_semantics=("parallel", "arbitrary"),
            vmem_limit_bytes=32 * 1024 * 1024),
    )(x_col, bfull_p, row_p, w_flat, rexp, texp, x_p, deg_inv_p, root_p, bias_p)

    return out[:N, :Cout]


# ----------------------------------------------------------------------------
# Pure-JAX f32 reference (mirrors the PyTorch forward, norm=True, root & bias).
# ----------------------------------------------------------------------------
def reference_forward(x, edge_index, pseudo, weight, root, bias,
                      kernel_size, is_open_spline):
    N = x.shape[0]
    row, col = edge_index[0], edge_index[1]
    basis, wi = spline_basis_linear(pseudo, kernel_size, is_open_spline)
    w_g = weight[wi]                                                        # [E,S,Cin,Cout]
    msg = jnp.einsum('es,ei,esio->eo', basis, x[col], w_g)
    agg = jnp.zeros((N, weight.shape[2]), jnp.float32).at[row].add(msg)
    deg = jnp.zeros((N,), jnp.float32).at[row].add(1.0)
    out = agg / jnp.maximum(deg, 1.0)[:, None]
    out = out + x @ root + bias
    return out


if __name__ == "__main__":
    # Small shapes consistent with the module's forward.
    N, Cin, Cout = 16, 32, 32
    dim, ksz = 2, 3
    K = ksz ** dim            # prod(kernel_size) = 9
    E = 64

    key = jax.random.PRNGKey(0)
    kx, ke, kp, kw, kr, kb = jax.random.split(key, 6)

    x = jax.random.normal(kx, (N, Cin), dtype=jnp.float32)
    edge_index = jax.random.randint(ke, (2, E), 0, N, dtype=jnp.int32)
    pseudo = jax.random.uniform(kp, (E, dim), dtype=jnp.float32)

    # Deterministic parameter init mirroring reset_parameters():
    # uniform(-1/sqrt(Cin*K), 1/sqrt(Cin*K))
    bound = 1.0 / math.sqrt(Cin * K)
    weight = jax.random.uniform(kw, (K, Cin, Cout), jnp.float32, -bound, bound)
    root = jax.random.uniform(kr, (Cin, Cout), jnp.float32, -bound, bound)
    bias = jax.random.uniform(kb, (Cout,), jnp.float32, -bound, bound)

    kernel_size = jnp.full((dim,), ksz, dtype=jnp.int32)
    is_open_spline = jnp.ones((dim,), dtype=jnp.int32)

    out = spline_sample_forward(x, edge_index, pseudo, weight, root, bias,
                                kernel_size, is_open_spline)
    out = jax.block_until_ready(out)

    ref = reference_forward(x, edge_index, pseudo, weight, root, bias,
                            kernel_size, is_open_spline)
    # bf16 MXU operands with f32 accumulation -> bf16-level tolerance vs f32 ref
    np.testing.assert_allclose(np.asarray(out), np.asarray(ref),
                               rtol=2e-2, atol=2e-2)
    print("KERNEL_OK")
</pallas_src>

<mosaic_0001>
module attributes {stable_mosaic.version = 11 : i64} {
  func.func @_spline_conv_kernel(%arg0: i32, %arg1: i32, %arg2: memref<128x32xbf16, #tpu.memory_space<vmem>>, %arg3: memref<128x9xbf16, #tpu.memory_space<vmem>>, %arg4: memref<1x128xi32, #tpu.memory_space<vmem>>, %arg5: memref<288x128xbf16, #tpu.memory_space<vmem>>, %arg6: memref<9x288xbf16, #tpu.memory_space<vmem>>, %arg7: memref<32x288xbf16, #tpu.memory_space<vmem>>, %arg8: memref<16x32xbf16, #tpu.memory_space<vmem>>, %arg9: memref<16x1xf32, #tpu.memory_space<vmem>>, %arg10: memref<32x128xbf16, #tpu.memory_space<vmem>>, %arg11: memref<1x128xf32, #tpu.memory_space<vmem>>, %arg12: memref<16x128xf32, #tpu.memory_space<vmem>>) attributes {dimension_semantics = [#tpu.dimension_semantics<parallel>, #tpu.dimension_semantics<arbitrary>], iteration_bounds = array<i64: 1, 1>, scalar_prefetch = 0 : i64, scratch_operands = 0 : i64, tpu.core_type = #tpu.core_type<tc>, window_params = [{transform_indices = @transform_0, window_bounds = array<i64: 128, 32>}, {transform_indices = @transform_1, window_bounds = array<i64: 128, 9>}, {transform_indices = @transform_2, window_bounds = array<i64: 1, 128>}, {pipeline_mode = #tpu.pipeline_mode<synchronous>, transform_indices = @transform_3, window_bounds = array<i64: 288, 128>}, {pipeline_mode = #tpu.pipeline_mode<synchronous>, transform_indices = @transform_4, window_bounds = array<i64: 9, 288>}, {pipeline_mode = #tpu.pipeline_mode<synchronous>, transform_indices = @transform_5, window_bounds = array<i64: 32, 288>}, {transform_indices = @transform_6, window_bounds = array<i64: 16, 32>}, {transform_indices = @transform_7, window_bounds = array<i64: 16, 1>}, {pipeline_mode = #tpu.pipeline_mode<synchronous>, transform_indices = @transform_8, window_bounds = array<i64: 32, 128>}, {pipeline_mode = #tpu.pipeline_mode<synchronous>, transform_indices = @transform_9, window_bounds = array<i64: 1, 128>}, {transform_indices = @transform_10, window_bounds = array<i64: 16, 128>}]} {
    %c0_i32 = arith.constant 0 : i32
    %0 = arith.cmpi eq, %arg1, %c0_i32 : i32
    %1 = arith.extui %0 : i1 to i32
    %c0_i32_0 = arith.constant 0 : i32
    %2 = arith.cmpi ne, %1, %c0_i32_0 : i32
    scf.if %2 {
      %cst_21 = arith.constant 0.000000e+00 : f32
      %31 = vector.broadcast %cst_21 : f32 to vector<16x128xf32>
      %c0_22 = arith.constant 0 : index
      %c0_23 = arith.constant 0 : index
      %32 = vector.load %arg12[%c0_22, %c0_23] : memref<16x128xf32, #tpu.memory_space<vmem>>, vector<16x128xf32>
      tpu.vector_store %arg12[%c0_22, %c0_23], %31 {strides = array<i32>} : memref<16x128xf32, #tpu.memory_space<vmem>>, vector<16x128xf32>,
    } else {
    }
    %c0 = arith.constant 0 : index
    %c0_1 = arith.constant 0 : index
    %3 = vector.load %arg3[%c0, %c0_1] : memref<128x9xbf16, #tpu.memory_space<vmem>>, vector<128x9xbf16>
    %c0_2 = arith.constant 0 : index
    %c0_3 = arith.constant 0 : index
    %4 = vector.load %arg6[%c0_2, %c0_3] : memref<9x288xbf16, #tpu.memory_space<vmem>>, vector<9x288xbf16>
    %cst = arith.constant dense<0.000000e+00> : vector<128x288xf32>
    %5 = tpu.matmul %3, %4, %cst {dimension_numbers = #tpu.dot_dimension_numbers<[1], [0], [0], [1], [0, 0, 1, 1], [], []>} : vector<128x9xbf16>, vector<9x288xbf16>, vector<128x288xf32> -> vector<128x288xf32>
    %c0_4 = arith.constant 0 : index
    %c0_5 = arith.constant 0 : index
    %6 = vector.load %arg2[%c0_4, %c0_5] : memref<128x32xbf16, #tpu.memory_space<vmem>>, vector<128x32xbf16>
    %c0_6 = arith.constant 0 : index
    %c0_7 = arith.constant 0 : index
    %7 = vector.load %arg7[%c0_6, %c0_7] : memref<32x288xbf16, #tpu.memory_space<vmem>>, vector<32x288xbf16>
    %cst_8 = arith.constant dense<0.000000e+00> : vector<128x288xf32>
    %8 = tpu.matmul %6, %7, %cst_8 {dimension_numbers = #tpu.dot_dimension_numbers<[1], [0], [0], [1], [0, 0, 1, 1], [], []>} : vector<128x32xbf16>, vector<32x288xbf16>, vector<128x288xf32> -> vector<128x288xf32>
    %9 = arith.mulf %5, %8 : vector<128x288xf32>
    %10 = arith.truncf %9 : vector<128x288xf32> to vector<128x288xbf16>
    %c0_9 = arith.constant 0 : index
    %c0_10 = arith.constant 0 : index
    %11 = vector.load %arg5[%c0_9, %c0_10] : memref<288x128xbf16, #tpu.memory_space<vmem>>, vector<288x128xbf16>
    %cst_11 = arith.constant dense<0.000000e+00> : vector<128x128xf32>
    %12 = tpu.matmul %10, %11, %cst_11 {dimension_numbers = #tpu.dot_dimension_numbers<[1], [0], [0], [1], [0, 0, 1, 1], [], []>} : vector<128x288xbf16>, vector<288x128xbf16>, vector<128x128xf32> -> vector<128x128xf32>
    %c16_i32 = arith.constant 16 : i32
    %13 = arith.muli %arg0, %c16_i32 : i32
    %14 = tpu.iota {dimensions = array<i32: 0>} : vector<16x128xi32>
    %15 = vector.broadcast %13 : i32 to vector<16x128xi32>
    %16 = arith.addi %15, %14 : vector<16x128xi32>
    %c0_12 = arith.constant 0 : index
    %c0_13 = arith.constant 0 : index
    %17 = vector.load %arg4[%c0_12, %c0_13] : memref<1x128xi32, #tpu.memory_space<vmem>>, vector<1x128xi32>
    %18 = vector.broadcast %17 : vector<1x128xi32> to vector<16x128xi32>
    %19 = arith.cmpi eq, %16, %18 : vector<16x128xi32>
    %20 = arith.extui %19 : vector<16x128xi1> to vector<16x128xi32>
    %21 = arith.sitofp %20 : vector<16x128xi32> to vector<16x128xf32>
    %22 = arith.truncf %21 : vector<16x128xf32> to vector<16x128xbf16>
    %c0_14 = arith.constant 0 : index
    %c0_15 = arith.constant 0 : index
    %23 = vector.load %arg12[%c0_14, %c0_15] : memref<16x128xf32, #tpu.memory_space<vmem>>, vector<16x128xf32>
    %24 = arith.truncf %12 : vector<128x128xf32> to vector<128x128xbf16>
    %cst_16 = arith.constant dense<0.000000e+00> : vector<16x128xf32>
    %25 = tpu.matmul %22, %24, %cst_16 {dimension_numbers = #tpu.dot_dimension_numbers<[1], [0], [0], [1], [0, 0, 1, 1], [], []>} : vector<16x128xbf16>, vector<128x128xbf16>, vector<16x128xf32> -> vector<16x128xf32>
    %26 = arith.addf %23, %25 : vector<16x128xf32>
    %c0_17 = arith.constant 0 : index
    %c0_18 = arith.constant 0 : index
    %27 = vector.load %arg12[%c0_17, %c0_18] : memref<16x128xf32, #tpu.memory_space<vmem>>, vector<16x128xf32>
    tpu.vector_store %arg12[%c0_17, %c0_18], %26 {strides = array<i32>} : memref<16x128xf32, #tpu.memory_space<vmem>>, vector<16x128xf32>,
    %c0_i32_19 = arith.constant 0 : i32
    %28 = arith.cmpi eq, %arg1, %c0_i32_19 : i32
    %29 = arith.extui %28 : i1 to i32
    %c0_i32_20 = arith.constant 0 : i32
    %30 = arith.cmpi ne, %29, %c0_i32_20 : i32
    scf.if %30 {
      %c0_21 = arith.constant 0 : index
      %c0_22 = arith.constant 0 : index
      %31 = vector.load %arg12[%c0_21, %c0_22] : memref<16x128xf32, #tpu.memory_space<vmem>>, vector<16x128xf32>
      %c0_23 = arith.constant 0 : index
      %c0_24 = arith.constant 0 : index
      %32 = vector.load %arg9[%c0_23, %c0_24] : memref<16x1xf32, #tpu.memory_space<vmem>>, vector<16x1xf32>
      %33 = vector.broadcast %32 : vector<16x1xf32> to vector<16x128xf32>
      %34 = arith.mulf %31, %33 : vector<16x128xf32>
      %c0_25 = arith.constant 0 : index
      %c0_26 = arith.constant 0 : index
      %35 = vector.load %arg8[%c0_25, %c0_26] : memref<16x32xbf16, #tpu.memory_space<vmem>>, vector<16x32xbf16>
      %c0_27 = arith.constant 0 : index
      %c0_28 = arith.constant 0 : index
      %36 = vector.load %arg10[%c0_27, %c0_28] : memref<32x128xbf16, #tpu.memory_space<vmem>>, vector<32x128xbf16>
      %cst_29 = arith.constant dense<0.000000e+00> : vector<16x128xf32>
      %37 = tpu.matmul %35, %36, %cst_29 {dimension_numbers = #tpu.dot_dimension_numbers<[1], [0], [0], [1], [0, 0, 1, 1], [], []>} : vector<16x32xbf16>, vector<32x128xbf16>, vector<16x128xf32> -> vector<16x128xf32>
      %38 = arith.addf %34, %37 : vector<16x128xf32>
      %c0_30 = arith.constant 0 : index
      %c0_31 = arith.constant 0 : index
      %39 = vector.load %arg11[%c0_30, %c0_31] : memref<1x128xf32, #tpu.memory_space<vmem>>, vector<1x128xf32>
      %40 = vector.broadcast %39 : vector<1x128xf32> to vector<16x128xf32>
      %41 = arith.addf %38, %40 : vector<16x128xf32>
      %c0_32 = arith.constant 0 : index
      %c0_33 = arith.constant 0 : index
      %42 = vector.load %arg12[%c0_32, %c0_33] : memref<16x128xf32, #tpu.memory_space<vmem>>, vector<16x128xf32>
      tpu.vector_store %arg12[%c0_32, %c0_33], %41 {strides = array<i32>} : memref<16x128xf32, #tpu.memory_space<vmem>>, vector<16x128xf32>,
    } else {
    }
    return
  }
  func.func @transform_0(%arg0: i32, %arg1: i32) -> (i32, i32) {
    %c0_i32 = arith.constant 0 : i32
    %c0_i32_0 = arith.constant 0 : i32
    return %arg1, %c0_i32 : i32, i32
  }
  func.func @transform_1(%arg0: i32, %arg1: i32) -> (i32, i32) {
    %c0_i32 = arith.constant 0 : i32
    %c0_i32_0 = arith.constant 0 : i32
    return %arg1, %c0_i32 : i32, i32
  }
  func.func @transform_2(%arg0: i32, %arg1: i32) -> (i32, i32) {
    %c0_i32 = arith.constant 0 : i32
    %c0_i32_0 = arith.constant 0 : i32
    return %c0_i32, %arg1 : i32, i32
  }
  func.func @transform_3(%arg0: i32, %arg1: i32) -> (i32, i32) {
    %c0_i32 = arith.constant 0 : i32
    %c0_i32_0 = arith.constant 0 : i32
    %c0_i32_1 = arith.constant 0 : i32
    return %c0_i32, %c0_i32_0 : i32, i32
  }
  func.func @transform_4(%arg0: i32, %arg1: i32) -> (i32, i32) {
    %c0_i32 = arith.constant 0 : i32
    %c0_i32_0 = arith.constant 0 : i32
    %c0_i32_1 = arith.constant 0 : i32
    return %c0_i32, %c0_i32_0 : i32, i32
  }
  func.func @transform_5(%arg0: i32, %arg1: i32) -> (i32, i32) {
    %c0_i32 = arith.constant 0 : i32
    %c0_i32_0 = arith.constant 0 : i32
    %c0_i32_1 = arith.constant 0 : i32
    return %c0_i32, %c0_i32_0 : i32, i32
  }
  func.func @transform_6(%arg0: i32, %arg1: i32) -> (i32, i32) {
    %c0_i32 = arith.constant 0 : i32
    %c0_i32_0 = arith.constant 0 : i32
    return %arg0, %c0_i32 : i32, i32
  }
  func.func @transform_7(%arg0: i32, %arg1: i32) -> (i32, i32) {
    %c0_i32 = arith.constant 0 : i32
    %c0_i32_0 = arith.constant 0 : i32
    return %arg0, %c0_i32 : i32, i32
  }
  func.func @transform_8(%arg0: i32, %arg1: i32) -> (i32, i32) {
    %c0_i32 = arith.constant 0 : i32
    %c0_i32_0 = arith.constant 0 : i32
    %c0_i32_1 = arith.constant 0 : i32
    return %c0_i32, %c0_i32_0 : i32, i32
  }
  func.func @transform_9(%arg0: i32, %arg1: i32) -> (i32, i32) {
    %c0_i32 = arith.constant 0 : i32
    %c0_i32_0 = arith.constant 0 : i32
    %c0_i32_1 = arith.constant 0 : i32
    return %c0_i32, %c0_i32_0 : i32, i32
  }
  func.func @transform_10(%arg0: i32, %arg1: i32) -> (i32, i32) {
    %c0_i32 = arith.constant 0 : i32
    %c0_i32_0 = arith.constant 0 : i32
    return %arg0, %c0_i32 : i32, i32
  }
}

</mosaic_0001>

<llo_original>
// kernel: tpu_custom_call.1
$region0: #{tpu_custom_call.1}
  #allocation0 [shape = 'u32[]', space=smem, size = 0x4, offset = 0x4, fixed_abs, tag = 'smem constant byte address 0x4 - core index']
  #allocation1 [shape = 'u32[144,128]{1,0:T(1,128)}', space=vmem, size = 0x12000, scoped, tag = 'internal scratch']
  %s0 = inlined_call_operand.vmem [shape: bf16[128,32], index: 0, kind: input, shape index: {}]
  %s1 = inlined_call_operand.vmem [shape: bf16[128,9], index: 1, kind: input, shape index: {}]
  %s2 = inlined_call_operand.hbm [shape: s32[1,128], index: 2, kind: input, shape index: {}]
  %s3 = inlined_call_operand.vmem [shape: bf16[288,128], index: 3, kind: input, shape index: {}]
  %s4 = inlined_call_operand.vmem [shape: bf16[9,288], index: 4, kind: input, shape index: {}]
  %s5 = inlined_call_operand.hbm [shape: bf16[32,288], index: 5, kind: input, shape index: {}]
  %s6 = inlined_call_operand.hbm [shape: bf16[16,32], index: 6, kind: input, shape index: {}]
  %s7 = inlined_call_operand.vmem [shape: f32[16,1], index: 7, kind: input, shape index: {}]
  %s8 = inlined_call_operand.vmem [shape: bf16[32,128], index: 8, kind: input, shape index: {}]
  %s9 = inlined_call_operand.vmem [shape: f32[1,128], index: 9, kind: input, shape index: {}]
  %s10 = inlined_call_operand.hbm [shape: f32[16,128], index: 10, kind: output, shape index: {}]
  %s11 = sld [smem:[#allocation0]]
  $region70: #{tpu_custom_call.1} parent=0
    _
  %s13 = ssub.s32 1, %s11
  %s14 = scalar_select 0, %s13, %s11
  $region1: #{tpu_custom_call.1} parent=0
    #allocation2 [shape = 'u8[512]{0}', space=vmem, size = 0x400, scoped, tag = 'input window, operand 2, single buffered']
    #allocation3 [shape = 's32[1]{0}', space=sflag, size = 0x4, scoped, tag = 'scoped memory for tpu_custom_call.1']
    #allocation4 [shape = 's32[1]{0}', space=sflag, size = 0x4, scoped, tag = 'scoped memory for tpu_custom_call.1']
    #allocation5 [shape = 'u8[24576]{0}', space=vmem, size = 0x6000, scoped, tag = 'input window, operand 5, single buffered']
    #allocation6 [shape = 's32[1]{0}', space=sflag, size = 0x4, scoped, tag = 'scoped memory for tpu_custom_call.1']
    #allocation7 [shape = 'u8[4096]{0}', space=vmem, size = 0x1000, scoped, tag = 'input window, operand 6, single buffered']
    #allocation8 [shape = 'u8[8192]{0}', space=vmem, size = 0x2000, scoped, tag = 'output window, operand 0, single buffered']
    %15 = vsyncpa [#allocation3], 0
    %16 = vsyncpa [#allocation6], 0
    %17 = vsyncpa [#allocation4], 0
    // Predicated region
    $region2: #{tpu_custom_call.1} parent=1 // pred_check
      _
    $region3: #{tpu_custom_call.1} parent=1 // pred_check_branch
      %19 = sbr.rel (0) target = $region5
    $region4: #{tpu_custom_call.1} parent=1 // pred_region
      _
    $region5: #{tpu_custom_call.1} parent=1 // pred_fallthru
      _
    // Predicated region
    $region6: #{tpu_custom_call.1} parent=1 // pred_check
      _
    $region7: #{tpu_custom_call.1} parent=1 // pred_check_branch
      %21 = sbr.rel (0) target = $region9
    $region8: #{tpu_custom_call.1} parent=1 // pred_region
      _
    $region9: #{tpu_custom_call.1} parent=1 // pred_fallthru
      _
    // Predicated region
    $region10: #{tpu_custom_call.1} parent=1 // pred_check
      _
    $region11: #{tpu_custom_call.1} parent=1 // pred_check_branch
      %23 = sbr.rel (0) target = $region13
    $region12: #{tpu_custom_call.1} parent=1 // pred_region
      %s25 = ssub.s32 16, 16
      %26 = vsyncadd [#allocation3], %s25
      %s28 = sshll.u32 [#allocation2], 4
      %s29 = int_to_ptr.vmem [resolvable:$true] %s28
      %31 = dma.hbm_to_vmem [thread:$0]  %s2, 16, %s29, [#allocation3]
    $region13: #{tpu_custom_call.1} parent=1 // pred_fallthru
      _
    // Predicated region
    $region14: #{tpu_custom_call.1} parent=1 // pred_check
      _
    $region15: #{tpu_custom_call.1} parent=1 // pred_check_branch
      %33 = sbr.rel (0) target = $region17
    $region16: #{tpu_custom_call.1} parent=1 // pred_region
      _
    $region17: #{tpu_custom_call.1} parent=1 // pred_fallthru
      _
    // Predicated region
    $region18: #{tpu_custom_call.1} parent=1 // pred_check
      _
    $region19: #{tpu_custom_call.1} parent=1 // pred_check_branch
      %35 = sbr.rel (0) target = $region21
    $region20: #{tpu_custom_call.1} parent=1 // pred_region
      _
    $region21: #{tpu_custom_call.1} parent=1 // pred_fallthru
      _
    // Predicated region
    $region22: #{tpu_custom_call.1} parent=1 // pred_check
      _
    $region23: #{tpu_custom_call.1} parent=1 // pred_check_branch
      %37 = sbr.rel (0) target = $region25
    $region24: #{tpu_custom_call.1} parent=1 // pred_region
      %s39 = ssub.s32 768, 768
      %40 = vsyncadd [#allocation6], %s39
      %s41 = sshll.u32 [#allocation5], 4
      %s42 = int_to_ptr.vmem [resolvable:$true] %s41
      %47 = dma.hbm_to_vmem [thread:$0]  %s5, 768, %s42, [#allocation6], 192, 192, 12
    $region25: #{tpu_custom_call.1} parent=1 // pred_fallthru
      _
    // Predicated region
    $region26: #{tpu_custom_call.1} parent=1 // pred_check
      _
    $region27: #{tpu_custom_call.1} parent=1 // pred_check_branch
      %49 = sbr.rel (0) target = $region29
    $region28: #{tpu_custom_call.1} parent=1 // pred_region
      %s51 = ssub.s32 128, 128
      %52 = vsyncadd [#allocation6], %s51
      %s53 = sshll.u32 [#allocation7], 4
      %s54 = int_to_ptr.vmem [resolvable:$true] %s53
      %59 = dma.hbm_to_vmem [thread:$0]  %s6, 128, %s54, [#allocation6], 64, 64, 4
    $region29: #{tpu_custom_call.1} parent=1 // pred_fallthru
      _
    // Predicated region
    $region30: #{tpu_custom_call.1} parent=1 // pred_check
      _
    $region31: #{tpu_custom_call.1} parent=1 // pred_check_branch
      %61 = sbr.rel (0) target = $region33
    $region32: #{tpu_custom_call.1} parent=1 // pred_region
      _
    $region33: #{tpu_custom_call.1} parent=1 // pred_fallthru
      _
    // Predicated region
    $region34: #{tpu_custom_call.1} parent=1 // pred_check
      _
    $region35: #{tpu_custom_call.1} parent=1 // pred_check_branch
      %63 = sbr.rel (0) target = $region37
    $region36: #{tpu_custom_call.1} parent=1 // pred_region
      _
    $region37: #{tpu_custom_call.1} parent=1 // pred_fallthru
      _
    // Predicated region
    $region38: #{tpu_custom_call.1} parent=1 // pred_check
      _
    $region39: #{tpu_custom_call.1} parent=1 // pred_check_branch
      %65 = sbr.rel (0) target = $region41
    $region40: #{tpu_custom_call.1} parent=1 // pred_region
      _
    $region41: #{tpu_custom_call.1} parent=1 // pred_fallthru
      _
    // Predicated region
    $region42: #{tpu_custom_call.1} parent=1 // pred_check
      _
    $region43: #{tpu_custom_call.1} parent=1 // pred_check_branch
      %67 = sbr.rel (0) target = $region45
    $region44: #{tpu_custom_call.1} parent=1 // pred_region
      %68 = dma.done [#allocation3], 16
    $region45: #{tpu_custom_call.1} parent=1 // pred_fallthru
      _
    // Predicated region
    $region46: #{tpu_custom_call.1} parent=1 // pred_check
      _
    $region47: #{tpu_custom_call.1} parent=1 // pred_check_branch
      %70 = sbr.rel (0) target = $region49
    $region48: #{tpu_custom_call.1} parent=1 // pred_region
      %71 = dma.done [#allocation6], 768
    $region49: #{tpu_custom_call.1} parent=1 // pred_fallthru
      _
    // Predicated region
    $region50: #{tpu_custom_call.1} parent=1 // pred_check
      _
    $region51: #{tpu_custom_call.1} parent=1 // pred_check_branch
      %73 = sbr.rel (0) target = $region53
    $region52: #{tpu_custom_call.1} parent=1 // pred_region
      %74 = dma.done [#allocation6], 128
    $region53: #{tpu_custom_call.1} parent=1 // pred_fallthru
      _
    %p76 = scmp.eq.s32.totalorder 0, 0
    // Predicated region
    $region54: #{tpu_custom_call.1} parent=1 // pred_check
      %p77 = pneg %p76
    $region55: #{tpu_custom_call.1} parent=1 // pred_check_branch
      %79 = sbr.rel (%p77) target = $region57
    $region56: #{tpu_custom_call.1} parent=1 // pred_region
      %80 = vst [vmem:[#allocation8] sm:$0xff] 0.0
      %81 = vst [vmem:[#allocation8 + $0x8] sm:$0xff] 0.0
    $region57: #{tpu_custom_call.1} parent=1 // pred_fallthru
      _
    %v82 = vld [vmem:[%s1] sm:$0xf]
    %v83 = vld [vmem:[%s1 + $0x4] sm:$0xf]
    %v84 = vld [vmem:[%s1 + $0x8] sm:$0xf]
    %v85 = vld [vmem:[%s1 + $0xc] sm:$0xf]
    %v86 = vld [vmem:[%s1 + $0x10] sm:$0xf]
    %v87 = vld [vmem:[%s1 + $0x14] sm:$0xf]
    %v88 = vld [vmem:[%s1 + $0x18] sm:$0xf]
    %v89 = vld [vmem:[%s1 + $0x1c] sm:$0xf]
    %v90 = vld [vmem:[%s1 + $0x20] sm:$0xf]
    %v91 = vld [vmem:[%s1 + $0x24] sm:$0xf]
    %v92 = vld [vmem:[%s1 + $0x28] sm:$0xf]
    %v93 = vld [vmem:[%s1 + $0x2c] sm:$0xf]
    %v94 = vld [vmem:[%s1 + $0x30] sm:$0xf]
    %v95 = vld [vmem:[%s1 + $0x34] sm:$0xf]
    %v96 = vld [vmem:[%s1 + $0x38] sm:$0xf]
    %v97 = vld [vmem:[%s1 + $0x3c] sm:$0xf]
    %v98 = vld [vmem:[%s4] sm:$0xff]
    %v99 = vld [vmem:[%s4 + $0x8] sm:$0xf]
    %v100 = vld [vmem:[%s4 + $0xc] sm:$0x11]
    %v101 = vld [vmem:[%s4 + $0x14] sm:$0x1]
    %v118 = vunpack.c.l.b16 %v82
    %v119 = vunpack.c.l.b16 %v83
    %v120 = vunpack.c.l.b16 %v84
    %v121 = vunpack.c.l.b16 %v85
    %v122 = vunpack.c.l.b16 %v86
    %v123 = vunpack.c.l.b16 %v87
    %v124 = vunpack.c.l.b16 %v88
    %v125 = vunpack.c.l.b16 %v89
    %v126 = vunpack.c.l.b16 %v90
    %v127 = vunpack.c.l.b16 %v91
    %v128 = vunpack.c.l.b16 %v92
    %v129 = vunpack.c.l.b16 %v93
    %v130 = vunpack.c.l.b16 %v94
    %v131 = vunpack.c.l.b16 %v95
    %v132 = vunpack.c.l.b16 %v96
    %v133 = vunpack.c.l.b16 %v97
    %v134 = vpack.c.b16 %v119, %v118
    %v135 = vpack.c.b16 %v121, %v120
    %v136 = vpack.c.b16 %v123, %v122
    %v137 = vpack.c.b16 %v125, %v124
    %v138 = vpack.c.b16 %v127, %v126
    %v139 = vpack.c.b16 %v129, %v128
    %v140 = vpack.c.b16 %v131, %v130
    %v141 = vpack.c.b16 %v133, %v132
    %v146 = vunpack.c.l.b16 %v98
    %v147 = vunpack.c.h.b16 %v98
    %v148 = vunpack.c.l.b16 %v99
    %v149 = vunpack.c.l.b16 %v100
    %v150 = vunpack.c.h.b16 %v100
    %v151 = vunpack.c.l.b16 %v101
    %v152 = vpack.c.b16 %v149, %v146
    %v153 = vpack.c.b16 %v150, %v147
    %v154 = vpack.c.b16 %v151, %v148
    %vm155 = vcmask 72704
    %v157 = vsel %vm155, %v134, 0
    %v160 = vsel %vm155, %v135, 0
    %v163 = vsel %vm155, %v136, 0
    %v166 = vsel %vm155, %v137, 0
    %v169 = vsel %vm155, %v138, 0
    %v172 = vsel %vm155, %v139, 0
    %v175 = vsel %vm155, %v140, 0
    %v178 = vsel %vm155, %v141, 0
    %vm180 = vcmask 1043456
    %vm181 = vcmask 1044480
    %v182 = vsel %vm180, 4294967295, 65535
    %v183 = vsel %vm181, %v182, 0
    %v185 = vand.u32 %v152, %v183
    %v188 = vand.u32 %v153, %v183
    %v191 = vand.u32 %v154, %v183
    %193 = vmatprep.subr.bf16.mxu0 %v188
    %194 = vmatpush1.bf16.msra.mxu0 %v185
    %195 = vmatprep.subr.bf16.mxu0 0
    %196 = vmatpush1.bf16.msra.mxu0 0
    %197 = vmatprep.subr.bf16.mxu0 0
    %198 = vmatpush1.bf16.msra.mxu0 0
    %199 = vmatprep.subr.bf16.mxu0 0
    %200 = vmatpush1.bf16.msra.mxu0 0
    %201 = vmatprep.subr.bf16.mxu0 0
    %202 = vmatpush1.bf16.msra.mxu0 0
    %203 = vmatprep.subr.bf16.mxu0 0
    %204 = vmatpush1.bf16.msra.mxu0 0
    %205 = vmatprep.subr.bf16.mxu0 0
    %206 = vmatpush1.bf16.msra.mxu0 0
    %207 = vmatprep.subr.bf16.mxu0 0
    %208 = vmatpush1.bf16.msra.mxu0 0
    %209 = vmatprep.subr.bf16.mxu0 0
    %210 = vmatpush1.bf16.msra.mxu0 0
    %211 = vmatprep.subr.bf16.mxu0 0
    %212 = vmatpush1.bf16.msra.mxu0 0
    %213 = vmatprep.subr.bf16.mxu0 0
    %214 = vmatpush1.bf16.msra.mxu0 0
    %215 = vmatprep.subr.bf16.mxu0 0
    %216 = vmatpush1.bf16.msra.mxu0 0
    %217 = vmatprep.subr.bf16.mxu0 0
    %218 = vmatpush1.bf16.msra.mxu0 0
    %219 = vmatprep.subr.bf16.mxu0 0
    %220 = vmatpush1.bf16.msra.mxu0 0
    %221 = vmatprep.subr.bf16.mxu0 0
    %222 = vmatpush1.bf16.msra.mxu0 0
    %223 = vmatprep.subr.bf16.mxu0 0
    %224 = vmatpush1.bf16.msra.mxu0 0
    %225 = vmatprep.mubr.bf16.mxu0 0
    %226 = vmatmul.mubr.bf16.gmra.mrb[0].mxu0 %v157
    %v227 = vpop.f32.mrb[0].mxu0
    %v228 = vadd.f32 0.0, %v227
    %v229 = vpop.f32.mrb[0].mxu0
    %v230 = vadd.f32 0.0, %v229
    %v231 = vpop.f32.mrb[0].mxu0
    %v232 = vadd.f32 0.0, %v231
    %v233 = vpop.f32.mrb[0].mxu0
    %v234 = vadd.f32 0.0, %v233
    %235 = vmatprep.mubr.bf16.mxu0 0
    %236 = vmatmul.mubr.bf16.gmra.mrb[0].mxu0 %v160
    %v237 = vpop.f32.mrb[0].mxu0
    %v238 = vadd.f32 0.0, %v237
    %v239 = vpop.f32.mrb[0].mxu0
    %v240 = vadd.f32 0.0, %v239
    %v241 = vpop.f32.mrb[0].mxu0
    %v242 = vadd.f32 0.0, %v241
    %v243 = vpop.f32.mrb[0].mxu0
    %v244 = vadd.f32 0.0, %v243
    %245 = vmatprep.mubr.bf16.mxu0 0
    %246 = vmatmul.mubr.bf16.gmra.mrb[0].mxu0 %v163
    %v247 = vpop.f32.mrb[0].mxu0
    %v248 = vadd.f32 0.0, %v247
    %v249 = vpop.f32.mrb[0].mxu0
    %v250 = vadd.f32 0.0, %v249
    %v251 = vpop.f32.mrb[0].mxu0
    %v252 = vadd.f32 0.0, %v251
    %v253 = vpop.f32.mrb[0].mxu0
    %v254 = vadd.f32 0.0, %v253
    %255 = vmatprep.mubr.bf16.mxu0 0
    %256 = vmatmul.mubr.bf16.gmra.mrb[0].mxu0 %v166
    %v257 = vpop.f32.mrb[0].mxu0
    %v258 = vadd.f32 0.0, %v257
    %v259 = vpop.f32.mrb[0].mxu0
    %v260 = vadd.f32 0.0, %v259
    %v261 = vpop.f32.mrb[0].mxu0
    %v262 = vadd.f32 0.0, %v261
    %v263 = vpop.f32.mrb[0].mxu0
    %v264 = vadd.f32 0.0, %v263
    %265 = vmatprep.mubr.bf16.mxu0 0
    %266 = vmatmul.mubr.bf16.gmra.mrb[0].mxu0 %v169
    %v267 = vpop.f32.mrb[0].mxu0
    %v268 = vadd.f32 0.0, %v267
    %v269 = vpop.f32.mrb[0].mxu0
    %v270 = vadd.f32 0.0, %v269
    %v271 = vpop.f32.mrb[0].mxu0
    %v272 = vadd.f32 0.0, %v271
    %v273 = vpop.f32.mrb[0].mxu0
    %v274 = vadd.f32 0.0, %v273
    %275 = vmatprep.mubr.bf16.mxu0 0
    %276 = vmatmul.mubr.bf16.gmra.mrb[0].mxu0 %v172
    %v277 = vpop.f32.mrb[0].mxu0
    %v278 = vadd.f32 0.0, %v277
    %v279 = vpop.f32.mrb[0].mxu0
    %v280 = vadd.f32 0.0, %v279
    %v281 = vpop.f32.mrb[0].mxu0
    %v282 = vadd.f32 0.0, %v281
    %v283 = vpop.f32.mrb[0].mxu0
    %v284 = vadd.f32 0.0, %v283
    %285 = vmatprep.mubr.bf16.mxu0 0
    %286 = vmatmul.mubr.bf16.gmra.mrb[0].mxu0 %v175
    %v287 = vpop.f32.mrb[0].mxu0
    %v288 = vadd.f32 0.0, %v287
    %v289 = vpop.f32.mrb[0].mxu0
    %v290 = vadd.f32 0.0, %v289
    %v291 = vpop.f32.mrb[0].mxu0
    %v292 = vadd.f32 0.0, %v291
    %v293 = vpop.f32.mrb[0].mxu0
    %v294 = vadd.f32 0.0, %v293
    %295 = vmatprep.mubr.bf16.mxu0 0
    %296 = vmatmul.mubr.bf16.gmra.mrb[0].mxu0 %v178
    %v297 = vpop.f32.mrb[0].mxu0
    %v298 = vadd.f32 0.0, %v297
    %v299 = vpop.f32.mrb[0].mxu0
    %v300 = vadd.f32 0.0, %v299
    %v301 = vpop.f32.mrb[0].mxu0
    %v302 = vadd.f32 0.0, %v301
    %v303 = vpop.f32.mrb[0].mxu0
    %v304 = vadd.f32 0.0, %v303
    %305 = vdwg.mxu0
    %306 = vmatprep.subr.bf16.mxu0 0
    %307 = vmatpush1.bf16.msra.mxu0 %v191
    %308 = vmatprep.subr.bf16.mxu0 0
    %309 = vmatpush1.bf16.msra.mxu0 0
    %310 = vmatprep.subr.bf16.mxu0 0
    %311 = vmatpush1.bf16.msra.mxu0 0
    %312 = vmatprep.subr.bf16.mxu0 0
    %313 = vmatpush1.bf16.msra.mxu0 0
    %314 = vmatprep.subr.bf16.mxu0 0
    %315 = vmatpush1.bf16.msra.mxu0 0
    %316 = vmatprep.subr.bf16.mxu0 0
    %317 = vmatpush1.bf16.msra.mxu0 0
    %318 = vmatprep.subr.bf16.mxu0 0
    %319 = vmatpush1.bf16.msra.mxu0 0
    %320 = vmatprep.subr.bf16.mxu0 0
    %321 = vmatpush1.bf16.msra.mxu0 0
    %322 = vmatprep.subr.bf16.mxu0 0
    %323 = vmatpush1.bf16.msra.mxu0 0
    %324 = vmatprep.subr.bf16.mxu0 0
    %325 = vmatpush1.bf16.msra.mxu0 0
    %326 = vmatprep.subr.bf16.mxu0 0
    %327 = vmatpush1.bf16.msra.mxu0 0
    %328 = vmatprep.subr.bf16.mxu0 0
    %329 = vmatpush1.bf16.msra.mxu0 0
    %330 = vmatprep.subr.bf16.mxu0 0
    %331 = vmatpush1.bf16.msra.mxu0 0
    %332 = vmatprep.subr.bf16.mxu0 0
    %333 = vmatpush1.bf16.msra.mxu0 0
    %334 = vmatprep.subr.bf16.mxu0 0
    %335 = vmatpush1.bf16.msra.mxu0 0
    %336 = vmatprep.subr.bf16.mxu0 0
    %337 = vmatpush1.bf16.msra.mxu0 0
    %338 = vmatprep.mubr.bf16.mxu0 0
    %339 = vmatmul.mubr.bf16.gmra.mrb[0].mxu0 %v157
    %v340 = vpop.f32.mrb[0].mxu0
    %v341 = vadd.f32 0.0, %v340
    %v342 = vpop.f32.mrb[0].mxu0
    %v343 = vpop.f32.mrb[0].mxu0
    %v344 = vadd.f32 0.0, %v343
    %v345 = vpop.f32.mrb[0].mxu0
    %346 = vmatprep.mubr.bf16.mxu0 0
    %347 = vmatmul.mubr.bf16.gmra.mrb[0].mxu0 %v160
    %v348 = vpop.f32.mrb[0].mxu0
    %v349 = vadd.f32 0.0, %v348
    %v350 = vpop.f32.mrb[0].mxu0
    %v351 = vpop.f32.mrb[0].mxu0
    %v352 = vadd.f32 0.0, %v351
    %v353 = vpop.f32.mrb[0].mxu0
    %354 = vmatprep.mubr.bf16.mxu0 0
    %355 = vmatmul.mubr.bf16.gmra.mrb[0].mxu0 %v163
    %v356 = vpop.f32.mrb[0].mxu0
    %v357 = vadd.f32 0.0, %v356
    %v358 = vpop.f32.mrb[0].mxu0
    %v359 = vpop.f32.mrb[0].mxu0
    %v360 = vadd.f32 0.0, %v359
    %v361 = vpop.f32.mrb[0].mxu0
    %362 = vmatprep.mubr.bf16.mxu0 0
    %363 = vmatmul.mubr.bf16.gmra.mrb[0].mxu0 %v166
    %v364 = vpop.f32.mrb[0].mxu0
    %v365 = vadd.f32 0.0, %v364
    %v366 = vpop.f32.mrb[0].mxu0
    %v367 = vpop.f32.mrb[0].mxu0
    %v368 = vadd.f32 0.0, %v367
    %v369 = vpop.f32.mrb[0].mxu0
    %370 = vmatprep.mubr.bf16.mxu0 0
    %371 = vmatmul.mubr.bf16.gmra.mrb[0].mxu0 %v169
    %v372 = vpop.f32.mrb[0].mxu0
    %v373 = vadd.f32 0.0, %v372
    %v374 = vpop.f32.mrb[0].mxu0
    %v375 = vpop.f32.mrb[0].mxu0
    %v376 = vadd.f32 0.0, %v375
    %v377 = vpop.f32.mrb[0].mxu0
    %378 = vmatprep.mubr.bf16.mxu0 0
    %379 = vmatmul.mubr.bf16.gmra.mrb[0].mxu0 %v172
    %v380 = vpop.f32.mrb[0].mxu0
    %v381 = vadd.f32 0.0, %v380
    %v382 = vpop.f32.mrb[0].mxu0
    %v383 = vpop.f32.mrb[0].mxu0
    %v384 = vadd.f32 0.0, %v383
    %v385 = vpop.f32.mrb[0].mxu0
    %386 = vmatprep.mubr.bf16.mxu0 0
    %387 = vmatmul.mubr.bf16.gmra.mrb[0].mxu0 %v175
    %v388 = vpop.f32.mrb[0].mxu0
    %v389 = vadd.f32 0.0, %v388
    %v390 = vpop.f32.mrb[0].mxu0
    %v391 = vpop.f32.mrb[0].mxu0
    %v392 = vadd.f32 0.0, %v391
    %v393 = vpop.f32.mrb[0].mxu0
    %394 = vmatprep.mubr.bf16.mxu0 0
    %395 = vmatmul.mubr.bf16.gmra.mrb[0].mxu0 %v178
    %v396 = vpop.f32.mrb[0].mxu0
    %v397 = vadd.f32 0.0, %v396
    %v398 = vpop.f32.mrb[0].mxu0
    %v399 = vpop.f32.mrb[0].mxu0
    %v400 = vadd.f32 0.0, %v399
    %v401 = vpop.f32.mrb[0].mxu0
    %402 = vdwg.mxu0
    %v403 = vld [vmem:[%s0] sm:$0xf]
    %v404 = vld [vmem:[%s0 + $0x4] sm:$0xf]
    %v405 = vld [vmem:[%s0 + $0x8] sm:$0xf]
    %v406 = vld [vmem:[%s0 + $0xc] sm:$0xf]
    %v407 = vld [vmem:[%s0 + $0x10] sm:$0xf]
    %v408 = vld [vmem:[%s0 + $0x14] sm:$0xf]
    %v409 = vld [vmem:[%s0 + $0x18] sm:$0xf]
    %v410 = vld [vmem:[%s0 + $0x1c] sm:$0xf]
    %v411 = vld [vmem:[%s0 + $0x20] sm:$0xf]
    %v412 = vld [vmem:[%s0 + $0x24] sm:$0xf]
    %v413 = vld [vmem:[%s0 + $0x28] sm:$0xf]
    %v414 = vld [vmem:[%s0 + $0x2c] sm:$0xf]
    %v415 = vld [vmem:[%s0 + $0x30] sm:$0xf]
    %v416 = vld [vmem:[%s0 + $0x34] sm:$0xf]
    %v417 = vld [vmem:[%s0 + $0x38] sm:$0xf]
    %v418 = vld [vmem:[%s0 + $0x3c] sm:$0xf]
    %v419 = vld [vmem:[#allocation5] sm:$0xff]
    %v420 = vld [vmem:[#allocation5 + $0x8] sm:$0xf]
    %v421 = vld [vmem:[#allocation5 + $0xc] sm:$0xff]
    %v422 = vld [vmem:[#allocation5 + $0x14] sm:$0xf]
    %v423 = vld [vmem:[#allocation5 + $0x18] sm:$0xff]
    %v424 = vld [vmem:[#allocation5 + $0x20] sm:$0xf]
    %v425 = vld [vmem:[#allocation5 + $0x24] sm:$0xff]
    %v426 = vld [vmem:[#allocation5 + $0x2c] sm:$0xf]
    %v443 = vunpack.c.l.b16 %v403
    %v444 = vunpack.c.l.b16 %v404
    %v445 = vunpack.c.l.b16 %v405
    %v446 = vunpack.c.l.b16 %v406
    %v447 = vunpack.c.l.b16 %v407
    %v448 = vunpack.c.l.b16 %v408
    %v449 = vunpack.c.l.b16 %v409
    %v450 = vunpack.c.l.b16 %v410
    %v451 = vunpack.c.l.b16 %v411
    %v452 = vunpack.c.l.b16 %v412
    %v453 = vunpack.c.l.b16 %v413
    %v454 = vunpack.c.l.b16 %v414
    %v455 = vunpack.c.l.b16 %v415
    %v456 = vunpack.c.l.b16 %v416
    %v457 = vunpack.c.l.b16 %v417
    %v458 = vunpack.c.l.b16 %v418
    %v459 = vpack.c.b16 %v444, %v443
    %v460 = vpack.c.b16 %v446, %v445
    %v461 = vpack.c.b16 %v448, %v447
    %v462 = vpack.c.b16 %v450, %v449
    %v463 = vpack.c.b16 %v452, %v451
    %v464 = vpack.c.b16 %v454, %v453
    %v465 = vpack.c.b16 %v456, %v455
    %v466 = vpack.c.b16 %v458, %v457
    %v475 = vunpack.c.l.b16 %v419
    %v476 = vunpack.c.h.b16 %v419
    %v477 = vunpack.c.l.b16 %v420
    %v478 = vunpack.c.l.b16 %v421
    %v479 = vunpack.c.h.b16 %v421
    %v480 = vunpack.c.l.b16 %v422
    %v481 = vunpack.c.l.b16 %v423
    %v482 = vunpack.c.h.b16 %v423
    %v483 = vunpack.c.l.b16 %v424
    %v484 = vunpack.c.l.b16 %v425
    %v485 = vunpack.c.h.b16 %v425
    %v486 = vunpack.c.l.b16 %v426
    %v487 = vpack.c.b16 %v478, %v475
    %v488 = vpack.c.b16 %v479, %v476
    %v489 = vpack.c.b16 %v480, %v477
    %v490 = vpack.c.b16 %v484, %v481
    %v491 = vpack.c.b16 %v485, %v482
    %v492 = vpack.c.b16 %v486, %v483
    %vm499 = vcmask 261120
    %v501 = vsel %vm499, %v459, 0
    %v504 = vsel %vm499, %v460, 0
    %v507 = vsel %vm499, %v461, 0
    %v510 = vsel %vm499, %v462, 0
    %v513 = vsel %vm499, %v463, 0
    %v516 = vsel %vm499, %v464, 0
    %v519 = vsel %vm499, %v465, 0
    %v522 = vsel %vm499, %v466, 0
    %524 = vmatprep.subr.bf16.mxu0 %v488
    %525 = vmatpush1.bf16.msra.mxu0 %v487
    %526 = vmatprep.subr.bf16.mxu0 %v491
    %527 = vmatpush1.bf16.msra.mxu0 %v490
    %528 = vmatprep.subr.bf16.mxu0 0
    %529 = vmatpush1.bf16.msra.mxu0 0
    %530 = vmatprep.subr.bf16.mxu0 0
    %531 = vmatpush1.bf16.msra.mxu0 0
    %532 = vmatprep.subr.bf16.mxu0 0
    %533 = vmatpush1.bf16.msra.mxu0 0
    %534 = vmatprep.subr.bf16.mxu0 0
    %535 = vmatpush1.bf16.msra.mxu0 0
    %536 = vmatprep.subr.bf16.mxu0 0
    %537 = vmatpush1.bf16.msra.mxu0 0
    %538 = vmatprep.subr.bf16.mxu0 0
    %539 = vmatpush1.bf16.msra.mxu0 0
    %540 = vmatprep.subr.bf16.mxu0 0
    %541 = vmatpush1.bf16.msra.mxu0 0
    %542 = vmatprep.subr.bf16.mxu0 0
    %543 = vmatpush1.bf16.msra.mxu0 0
    %544 = vmatprep.subr.bf16.mxu0 0
    %545 = vmatpush1.bf16.msra.mxu0 0
    %546 = vmatprep.subr.bf16.mxu0 0
    %547 = vmatpush1.bf16.msra.mxu0 0
    %548 = vmatprep.subr.bf16.mxu0 0
    %549 = vmatpush1.bf16.msra.mxu0 0
    %550 = vmatprep.subr.bf16.mxu0 0
    %551 = vmatpush1.bf16.msra.mxu0 0
    %552 = vmatprep.subr.bf16.mxu0 0
    %553 = vmatpush1.bf16.msra.mxu0 0
    %554 = vmatprep.subr.bf16.mxu0 0
    %555 = vmatpush1.bf16.msra.mxu0 0
    %556 = vmatprep.mubr.bf16.mxu0 0
    %557 = vmatmul.mubr.bf16.gmra.mrb[0].mxu0 %v501
    %v558 = vpop.f32.mrb[0].mxu0
    %v559 = vadd.f32 0.0, %v558
    %v560 = vpop.f32.mrb[0].mxu0
    %v561 = vadd.f32 0.0, %v560
    %v562 = vpop.f32.mrb[0].mxu0
    %v563 = vadd.f32 0.0, %v562
    %v564 = vpop.f32.mrb[0].mxu0
    %v565 = vadd.f32 0.0, %v564
    %566 = vmatprep.mubr.bf16.mxu0 0
    %567 = vmatmul.mubr.bf16.gmra.mrb[0].mxu0 %v504
    %v568 = vpop.f32.mrb[0].mxu0
    %v569 = vadd.f32 0.0, %v568
    %v570 = vpop.f32.mrb[0].mxu0
    %v571 = vadd.f32 0.0, %v570
    %v572 = vpop.f32.mrb[0].mxu0
    %v573 = vadd.f32 0.0, %v572
    %v574 = vpop.f32.mrb[0].mxu0
    %v575 = vadd.f32 0.0, %v574
    %576 = vmatprep.mubr.bf16.mxu0 0
    %577 = vmatmul.mubr.bf16.gmra.mrb[0].mxu0 %v507
    %v578 = vpop.f32.mrb[0].mxu0
    %v579 = vadd.f32 0.0, %v578
    %v580 = vpop.f32.mrb[0].mxu0
    %v581 = vadd.f32 0.0, %v580
    %v582 = vpop.f32.mrb[0].mxu0
    %v583 = vadd.f32 0.0, %v582
    %v584 = vpop.f32.mrb[0].mxu0
    %v585 = vadd.f32 0.0, %v584
    %586 = vmatprep.mubr.bf16.mxu0 0
    %587 = vmatmul.mubr.bf16.gmra.mrb[0].mxu0 %v510
    %v588 = vpop.f32.mrb[0].mxu0
    %v589 = vadd.f32 0.0, %v588
    %v590 = vpop.f32.mrb[0].mxu0
    %v591 = vadd.f32 0.0, %v590
    %v592 = vpop.f32.mrb[0].mxu0
    %v593 = vadd.f32 0.0, %v592
    %v594 = vpop.f32.mrb[0].mxu0
    %v595 = vadd.f32 0.0, %v594
    %596 = vmatprep.mubr.bf16.mxu0 0
    %597 = vmatmul.mubr.bf16.gmra.mrb[0].mxu0 %v513
    %v598 = vpop.f32.mrb[0].mxu0
    %v599 = vadd.f32 0.0, %v598
    %v600 = vpop.f32.mrb[0].mxu0
    %v601 = vadd.f32 0.0, %v600
    %v602 = vpop.f32.mrb[0].mxu0
    %v603 = vadd.f32 0.0, %v602
    %v604 = vpop.f32.mrb[0].mxu0
    %v605 = vadd.f32 0.0, %v604
    %606 = vmatprep.mubr.bf16.mxu0 0
    %607 = vmatmul.mubr.bf16.gmra.mrb[0].mxu0 %v516
    %v608 = vpop.f32.mrb[0].mxu0
    %v609 = vadd.f32 0.0, %v608
    %v610 = vpop.f32.mrb[0].mxu0
    %v611 = vadd.f32 0.0, %v610
    %v612 = vpop.f32.mrb[0].mxu0
    %v613 = vadd.f32 0.0, %v612
    %v614 = vpop.f32.mrb[0].mxu0
    %v615 = vadd.f32 0.0, %v614
    %616 = vmatprep.mubr.bf16.mxu0 0
    %617 = vmatmul.mubr.bf16.gmra.mrb[0].mxu0 %v519
    %v618 = vpop.f32.mrb[0].mxu0
    %v619 = vadd.f32 0.0, %v618
    %v620 = vpop.f32.mrb[0].mxu0
    %v621 = vadd.f32 0.0, %v620
    %v622 = vpop.f32.mrb[0].mxu0
    %v623 = vadd.f32 0.0, %v622
    %v624 = vpop.f32.mrb[0].mxu0
    %v625 = vadd.f32 0.0, %v624
    %626 = vmatprep.mubr.bf16.mxu0 0
    %627 = vmatmul.mubr.bf16.gmra.mrb[0].mxu0 %v522
    %v628 = vpop.f32.mrb[0].mxu0
    %v629 = vadd.f32 0.0, %v628
    %v630 = vpop.f32.mrb[0].mxu0
    %v631 = vadd.f32 0.0, %v630
    %v632 = vpop.f32.mrb[0].mxu0
    %v633 = vadd.f32 0.0, %v632
    %v634 = vpop.f32.mrb[0].mxu0
    %v635 = vadd.f32 0.0, %v634
    %636 = vdwg.mxu0
    %637 = vmatprep.subr.bf16.mxu0 0
    %638 = vmatpush1.bf16.msra.mxu0 %v489
    %639 = vmatprep.subr.bf16.mxu0 0
    %640 = vmatpush1.bf16.msra.mxu0 %v492
    %641 = vmatprep.subr.bf16.mxu0 0
    %642 = vmatpush1.bf16.msra.mxu0 0
    %643 = vmatprep.subr.bf16.mxu0 0
    %644 = vmatpush1.bf16.msra.mxu0 0
    %645 = vmatprep.subr.bf16.mxu0 0
    %646 = vmatpush1.bf16.msra.mxu0 0
    %647 = vmatprep.subr.bf16.mxu0 0
    %648 = vmatpush1.bf16.msra.mxu0 0
    %649 = vmatprep.subr.bf16.mxu0 0
    %650 = vmatpush1.bf16.msra.mxu0 0
    %651 = vmatprep.subr.bf16.mxu0 0
    %652 = vmatpush1.bf16.msra.mxu0 0
    %653 = vmatprep.subr.bf16.mxu0 0
    %654 = vmatpush1.bf16.msra.mxu0 0
    %655 = vmatprep.subr.bf16.mxu0 0
    %656 = vmatpush1.bf16.msra.mxu0 0
    %657 = vmatprep.subr.bf16.mxu0 0
    %658 = vmatpush1.bf16.msra.mxu0 0
    %659 = vmatprep.subr.bf16.mxu0 0
    %660 = vmatpush1.bf16.msra.mxu0 0
    %661 = vmatprep.subr.bf16.mxu0 0
    %662 = vmatpush1.bf16.msra.mxu0 0
    %663 = vmatprep.subr.bf16.mxu0 0
    %664 = vmatpush1.bf16.msra.mxu0 0
    %665 = vmatprep.subr.bf16.mxu0 0
    %666 = vmatpush1.bf16.msra.mxu0 0
    %667 = vmatprep.subr.bf16.mxu0 0
    %668 = vmatpush1.bf16.msra.mxu0 0
    %669 = vmatprep.mubr.bf16.mxu0 0
    %670 = vmatmul.mubr.bf16.gmra.mrb[0].mxu0 %v501
    %v671 = vpop.f32.mrb[0].mxu0
    %v672 = vadd.f32 0.0, %v671
    %v673 = vpop.f32.mrb[0].mxu0
    %v674 = vpop.f32.mrb[0].mxu0
    %v675 = vadd.f32 0.0, %v674
    %v676 = vpop.f32.mrb[0].mxu0
    %677 = vmatprep.mubr.bf16.mxu0 0
    %678 = vmatmul.mubr.bf16.gmra.mrb[0].mxu0 %v504
    %v679 = vpop.f32.mrb[0].mxu0
    %v680 = vadd.f32 0.0, %v679
    %v681 = vpop.f32.mrb[0].mxu0
    %v682 = vpop.f32.mrb[0].mxu0
    %v683 = vadd.f32 0.0, %v682
    %v684 = vpop.f32.mrb[0].mxu0
    %685 = vmatprep.mubr.bf16.mxu0 0
    %686 = vmatmul.mubr.bf16.gmra.mrb[0].mxu0 %v507
    %v687 = vpop.f32.mrb[0].mxu0
    %v688 = vadd.f32 0.0, %v687
    %v689 = vpop.f32.mrb[0].mxu0
    %v690 = vpop.f32.mrb[0].mxu0
    %v691 = vadd.f32 0.0, %v690
    %v692 = vpop.f32.mrb[0].mxu0
    %693 = vmatprep.mubr.bf16.mxu0 0
    %694 = vmatmul.mubr.bf16.gmra.mrb[0].mxu0 %v510
    %v695 = vpop.f32.mrb[0].mxu0
    %v696 = vadd.f32 0.0, %v695
    %v697 = vpop.f32.mrb[0].mxu0
    %v698 = vpop.f32.mrb[0].mxu0
    %v699 = vadd.f32 0.0, %v698
    %v700 = vpop.f32.mrb[0].mxu0
    %701 = vmatprep.mubr.bf16.mxu0 0
    %702 = vmatmul.mubr.bf16.gmra.mrb[0].mxu0 %v513
    %v703 = vpop.f32.mrb[0].mxu0
    %v704 = vadd.f32 0.0, %v703
    %v705 = vpop.f32.mrb[0].mxu0
    %v706 = vpop.f32.mrb[0].mxu0
    %v707 = vadd.f32 0.0, %v706
    %v708 = vpop.f32.mrb[0].mxu0
    %709 = vmatprep.mubr.bf16.mxu0 0
    %710 = vmatmul.mubr.bf16.gmra.mrb[0].mxu0 %v516
    %v711 = vpop.f32.mrb[0].mxu0
    %v712 = vadd.f32 0.0, %v711
    %v713 = vpop.f32.mrb[0].mxu0
    %v714 = vpop.f32.mrb[0].mxu0
    %v715 = vadd.f32 0.0, %v714
    %v716 = vpop.f32.mrb[0].mxu0
    %717 = vmatprep.mubr.bf16.mxu0 0
    %718 = vmatmul.mubr.bf16.gmra.mrb[0].mxu0 %v519
    %v719 = vpop.f32.mrb[0].mxu0
    %v720 = vadd.f32 0.0, %v719
    %v721 = vpop.f32.mrb[0].mxu0
    %v722 = vpop.f32.mrb[0].mxu0
    %v723 = vadd.f32 0.0, %v722
    %v724 = vpop.f32.mrb[0].mxu0
    %725 = vmatprep.mubr.bf16.mxu0 0
    %726 = vmatmul.mubr.bf16.gmra.mrb[0].mxu0 %v522
    %v727 = vpop.f32.mrb[0].mxu0
    %v728 = vadd.f32 0.0, %v727
    %v729 = vpop.f32.mrb[0].mxu0
    %v730 = vpop.f32.mrb[0].mxu0
    %v731 = vadd.f32 0.0, %v730
    %v732 = vpop.f32.mrb[0].mxu0
    %733 = vdwg.mxu0
    %v734 = vmul.f32 %v228, %v559
    %v735 = vmul.f32 %v230, %v561
    %v736 = vmul.f32 %v341, %v672
    %v737 = vmul.f32 %v232, %v563
    %v738 = vmul.f32 %v234, %v565
    %v739 = vmul.f32 %v344, %v675
    %v740 = vmul.f32 %v238, %v569
    %v741 = vmul.f32 %v240, %v571
    %v742 = vmul.f32 %v349, %v680
    %v743 = vmul.f32 %v242, %v573
    %v744 = vmul.f32 %v244, %v575
    %v745 = vmul.f32 %v352, %v683
    %v746 = vmul.f32 %v248, %v579
    %v747 = vmul.f32 %v250, %v581
    %v748 = vmul.f32 %v357, %v688
    %v749 = vmul.f32 %v252, %v583
    %v750 = vmul.f32 %v254, %v585
    %v751 = vmul.f32 %v360, %v691
    %v752 = vmul.f32 %v258, %v589
    %v753 = vmul.f32 %v260, %v591
    %v754 = vmul.f32 %v365, %v696
    %v755 = vmul.f32 %v262, %v593
    %v756 = vmul.f32 %v264, %v595
    %v757 = vmul.f32 %v368, %v699
    %v758 = vmul.f32 %v268, %v599
    %v759 = vmul.f32 %v270, %v601
    %v760 = vmul.f32 %v373, %v704
    %v761 = vmul.f32 %v272, %v603
    %v762 = vmul.f32 %v274, %v605
    %v763 = vmul.f32 %v376, %v707
    %v764 = vmul.f32 %v278, %v609
    %v765 = vmul.f32 %v280, %v611
    %v766 = vmul.f32 %v381, %v712
    %v767 = vmul.f32 %v282, %v613
    %v768 = vmul.f32 %v284, %v615
    %v769 = vmul.f32 %v384, %v715
    %v770 = vmul.f32 %v288, %v619
    %v771 = vmul.f32 %v290, %v621
    %v772 = vmul.f32 %v389, %v720
    %v773 = vmul.f32 %v292, %v623
    %v774 = vmul.f32 %v294, %v625
    %v775 = vmul.f32 %v392, %v723
    %v776 = vmul.f32 %v298, %v629
    %v777 = vmul.f32 %v300, %v631
    %v778 = vmul.f32 %v397, %v728
    %v779 = vmul.f32 %v302, %v633
    %v780 = vmul.f32 %v304, %v635
    %v781 = vmul.f32 %v400, %v731
    %v782 = vpack.c.bf16 %v737, %v734
    %v783 = vpack.c.bf16 %v738, %v735
    %v784 = vpack.c.bf16 %v739, %v736
    %v785 = vpack.c.bf16 %v743, %v740
    %v786 = vpack.c.bf16 %v744, %v741
    %v787 = vpack.c.bf16 %v745, %v742
    %v788 = vpack.c.bf16 %v749, %v746
    %v789 = vpack.c.bf16 %v750, %v747
    %v790 = vpack.c.bf16 %v751, %v748
    %v791 = vpack.c.bf16 %v755, %v752
    %v792 = vpack.c.bf16 %v756, %v753
    %v793 = vpack.c.bf16 %v757, %v754
    %v794 = vpack.c.bf16 %v761, %v758
    %v795 = vpack.c.bf16 %v762, %v759
    %v796 = vpack.c.bf16 %v763, %v760
    %v797 = vpack.c.bf16 %v767, %v764
    %v798 = vpack.c.bf16 %v768, %v765
    %v799 = vpack.c.bf16 %v769, %v766
    %v800 = vpack.c.bf16 %v773, %v770
    %v801 = vpack.c.bf16 %v774, %v771
    %v802 = vpack.c.bf16 %v775, %v772
    %v803 = vpack.c.bf16 %v779, %v776
    %v804 = vpack.c.bf16 %v780, %v777
    %v805 = vpack.c.bf16 %v781, %v778
    %v806 = vld [vmem:[%s3] sm:$0xf]
    %v807 = vld [vmem:[%s3 + $0x4] sm:$0xf]
    %v808 = vld [vmem:[%s3 + $0x8] sm:$0xf]
    %v809 = vld [vmem:[%s3 + $0xc] sm:$0xf]
    %v810 = vld [vmem:[%s3 + $0x10] sm:$0xf]
    %v811 = vld [vmem:[%s3 + $0x14] sm:$0xf]
    %v812 = vld [vmem:[%s3 + $0x18] sm:$0xf]
    %v813 = vld [vmem:[%s3 + $0x1c] sm:$0xf]
    %v814 = vld [vmem:[%s3 + $0x20] sm:$0xf]
    %v815 = vld [vmem:[%s3 + $0x24] sm:$0xf]
    %v816 = vld [vmem:[%s3 + $0x28] sm:$0xf]
    %v817 = vld [vmem:[%s3 + $0x2c] sm:$0xf]
    %v818 = vld [vmem:[%s3 + $0x30] sm:$0xf]
    %v819 = vld [vmem:[%s3 + $0x34] sm:$0xf]
    %v820 = vld [vmem:[%s3 + $0x38] sm:$0xf]
    %v821 = vld [vmem:[%s3 + $0x3c] sm:$0xf]
    %v822 = vld [vmem:[%s3 + $0x40] sm:$0xf]
    %v823 = vld [vmem:[%s3 + $0x44] sm:$0xf]
    %v824 = vld [vmem:[%s3 + $0x48] sm:$0xf]
    %v825 = vld [vmem:[%s3 + $0x4c] sm:$0xf]
    %v826 = vld [vmem:[%s3 + $0x50] sm:$0xf]
    %v827 = vld [vmem:[%s3 + $0x54] sm:$0xf]
    %v828 = vld [vmem:[%s3 + $0x58] sm:$0xf]
    %v829 = vld [vmem:[%s3 + $0x5c] sm:$0xf]
    %v830 = vld [vmem:[%s3 + $0x60] sm:$0xf]
    %v831 = vld [vmem:[%s3 + $0x64] sm:$0xf]
    %v832 = vld [vmem:[%s3 + $0x68] sm:$0xf]
    %v833 = vld [vmem:[%s3 + $0x6c] sm:$0xf]
    %v834 = vld [vmem:[%s3 + $0x70] sm:$0xf]
    %v835 = vld [vmem:[%s3 + $0x74] sm:$0xf]
    %v836 = vld [vmem:[%s3 + $0x78] sm:$0xf]
    %v837 = vld [vmem:[%s3 + $0x7c] sm:$0xf]
    %v838 = vld [vmem:[%s3 + $0x80] sm:$0xf]
    %v839 = vld [vmem:[%s3 + $0x84] sm:$0xf]
    %v840 = vld [vmem:[%s3 + $0x88] sm:$0xf]
    %v841 = vld [vmem:[%s3 + $0x8c] sm:$0xf]
    %v878 = vunpack.c.l.b16 %v806
    %v879 = vunpack.c.l.b16 %v807
    %v880 = vunpack.c.l.b16 %v808
    %v881 = vunpack.c.l.b16 %v809
    %v882 = vunpack.c.l.b16 %v810
    %v883 = vunpack.c.l.b16 %v811
    %v884 = vunpack.c.l.b16 %v812
    %v885 = vunpack.c.l.b16 %v813
    %v886 = vunpack.c.l.b16 %v814
    %v887 = vunpack.c.l.b16 %v815
    %v888 = vunpack.c.l.b16 %v816
    %v889 = vunpack.c.l.b16 %v817
    %v890 = vunpack.c.l.b16 %v818
    %v891 = vunpack.c.l.b16 %v819
    %v892 = vunpack.c.l.b16 %v820
    %v893 = vunpack.c.l.b16 %v821
    %v894 = vunpack.c.l.b16 %v822
    %v895 = vunpack.c.l.b16 %v823
    %v896 = vunpack.c.l.b16 %v824
    %v897 = vunpack.c.l.b16 %v825
    %v898 = vunpack.c.l.b16 %v826
    %v899 = vunpack.c.l.b16 %v827
    %v900 = vunpack.c.l.b16 %v828
    %v901 = vunpack.c.l.b16 %v829
    %v902 = vunpack.c.l.b16 %v830
    %v903 = vunpack.c.l.b16 %v831
    %v904 = vunpack.c.l.b16 %v832
    %v905 = vunpack.c.l.b16 %v833
    %v906 = vunpack.c.l.b16 %v834
    %v907 = vunpack.c.l.b16 %v835
    %v908 = vunpack.c.l.b16 %v836
    %v909 = vunpack.c.l.b16 %v837
    %v910 = vunpack.c.l.b16 %v838
    %v911 = vunpack.c.l.b16 %v839
    %v912 = vunpack.c.l.b16 %v840
    %v913 = vunpack.c.l.b16 %v841
    %v914 = vpack.c.b16 %v879, %v878
    %v915 = vpack.c.b16 %v881, %v880
    %v916 = vpack.c.b16 %v883, %v882
    %v917 = vpack.c.b16 %v885, %v884
    %v918 = vpack.c.b16 %v887, %v886
    %v919 = vpack.c.b16 %v889, %v888
    %v920 = vpack.c.b16 %v891, %v890
    %v921 = vpack.c.b16 %v893, %v892
    %v922 = vpack.c.b16 %v895, %v894
    %v923 = vpack.c.b16 %v897, %v896
    %v924 = vpack.c.b16 %v899, %v898
    %v925 = vpack.c.b16 %v901, %v900
    %v926 = vpack.c.b16 %v903, %v902
    %v927 = vpack.c.b16 %v905, %v904
    %v928 = vpack.c.b16 %v907, %v906
    %v929 = vpack.c.b16 %v909, %v908
    %v930 = vpack.c.b16 %v911, %v910
    %v931 = vpack.c.b16 %v913, %v912
    %v951 = vsel %vm499, %v784, 0
    %v954 = vsel %vm499, %v787, 0
    %v957 = vsel %vm499, %v790, 0
    %v960 = vsel %vm499, %v793, 0
    %v963 = vsel %vm499, %v796, 0
    %v966 = vsel %vm499, %v799, 0
    %v969 = vsel %vm499, %v802, 0
    %v972 = vsel %vm499, %v805, 0
    %974 = vmatprep.subr.bf16.mxu0 0
    %975 = vmatpush1.bf16.msra.mxu0 %v914
    %976 = vmatprep.subr.bf16.mxu0 0
    %977 = vmatpush1.bf16.msra.mxu0 %v915
    %978 = vmatprep.subr.bf16.mxu0 0
    %979 = vmatpush1.bf16.msra.mxu0 %v916
    %980 = vmatprep.subr.bf16.mxu0 0
    %981 = vmatpush1.bf16.msra.mxu0 %v917
    %982 = vmatprep.subr.bf16.mxu0 0
    %983 = vmatpush1.bf16.msra.mxu0 %v918
    %984 = vmatprep.subr.bf16.mxu0 0
    %985 = vmatpush1.bf16.msra.mxu0 %v919
    %986 = vmatprep.subr.bf16.mxu0 0
    %987 = vmatpush1.bf16.msra.mxu0 %v920
    %988 = vmatprep.subr.bf16.mxu0 0
    %989 = vmatpush1.bf16.msra.mxu0 %v921
    %990 = vmatprep.subr.bf16.mxu0 0
    %991 = vmatpush1.bf16.msra.mxu0 %v922
    %992 = vmatprep.subr.bf16.mxu0 0
    %993 = vmatpush1.bf16.msra.mxu0 %v923
    %994 = vmatprep.subr.bf16.mxu0 0
    %995 = vmatpush1.bf16.msra.mxu0 %v924
    %996 = vmatprep.subr.bf16.mxu0 0
    %997 = vmatpush1.bf16.msra.mxu0 %v925
    %998 = vmatprep.subr.bf16.mxu0 0
    %999 = vmatpush1.bf16.msra.mxu0 %v926
    %1000 = vmatprep.subr.bf16.mxu0 0
    %1001 = vmatpush1.bf16.msra.mxu0 %v927
    %1002 = vmatprep.subr.bf16.mxu0 0
    %1003 = vmatpush1.bf16.msra.mxu0 %v928
    %1004 = vmatprep.subr.bf16.mxu0 0
    %1005 = vmatpush1.bf16.msra.mxu0 %v929
    %1006 = vmatprep.mubr.bf16.mxu0 %v783
    %1007 = vmatmul.mubr.bf16.gmra.mrb[0].mxu0 %v782
    %v1008 = vpop.f32.mrb[0].mxu0
    %v1009 = vadd.f32 0.0, %v1008
    %v1010 = vpop.f32.mrb[0].mxu0
    %v1011 = vpop.f32.mrb[0].mxu0
    %v1012 = vadd.f32 0.0, %v1011
    %v1013 = vpop.f32.mrb[0].mxu0
    %1014 = vmatprep.mubr.bf16.mxu0 %v786
    %1015 = vmatmul.mubr.bf16.gmra.mrb[0].mxu0 %v785
    %v1016 = vpop.f32.mrb[0].mxu0
    %v1017 = vadd.f32 0.0, %v1016
    %v1018 = vpop.f32.mrb[0].mxu0
    %v1019 = vpop.f32.mrb[0].mxu0
    %v1020 = vadd.f32 0.0, %v1019
    %v1021 = vpop.f32.mrb[0].mxu0
    %1022 = vmatprep.mubr.bf16.mxu0 %v789
    %1023 = vmatmul.mubr.bf16.gmra.mrb[0].mxu0 %v788
    %v1024 = vpop.f32.mrb[0].mxu0
    %v1025 = vadd.f32 0.0, %v1024
    %v1026 = vpop.f32.mrb[0].mxu0
    %v1027 = vpop.f32.mrb[0].mxu0
    %v1028 = vadd.f32 0.0, %v1027
    %v1029 = vpop.f32.mrb[0].mxu0
    %1030 = vmatprep.mubr.bf16.mxu0 %v792
    %1031 = vmatmul.mubr.bf16.gmra.mrb[0].mxu0 %v791
    %v1032 = vpop.f32.mrb[0].mxu0
    %v1033 = vadd.f32 0.0, %v1032
    %v1034 = vpop.f32.mrb[0].mxu0
    %v1035 = vpop.f32.mrb[0].mxu0
    %v1036 = vadd.f32 0.0, %v1035
    %v1037 = vpop.f32.mrb[0].mxu0
    %1038 = vmatprep.mubr.bf16.mxu0 %v795
    %1039 = vmatmul.mubr.bf16.gmra.mrb[0].mxu0 %v794
    %v1040 = vpop.f32.mrb[0].mxu0
    %v1041 = vadd.f32 0.0, %v1040
    %v1042 = vpop.f32.mrb[0].mxu0
    %v1043 = vpop.f32.mrb[0].mxu0
    %v1044 = vadd.f32 0.0, %v1043
    %v1045 = vpop.f32.mrb[0].mxu0
    %1046 = vmatprep.mubr.bf16.mxu0 %v798
    %1047 = vmatmul.mubr.bf16.gmra.mrb[0].mxu0 %v797
    %v1048 = vpop.f32.mrb[0].mxu0
    %v1049 = vadd.f32 0.0, %v1048
    %v1050 = vpop.f32.mrb[0].mxu0
    %v1051 = vpop.f32.mrb[0].mxu0
    %v1052 = vadd.f32 0.0, %v1051
    %v1053 = vpop.f32.mrb[0].mxu0
    %1054 = vmatprep.mubr.bf16.mxu0 %v801
    %1055 = vmatmul.mubr.bf16.gmra.mrb[0].mxu0 %v800
    %v1056 = vpop.f32.mrb[0].mxu0
    %v1057 = vadd.f32 0.0, %v1056
    %v1058 = vpop.f32.mrb[0].mxu0
    %v1059 = vpop.f32.mrb[0].mxu0
    %v1060 = vadd.f32 0.0, %v1059
    %v1061 = vpop.f32.mrb[0].mxu0
    %1062 = vmatprep.mubr.bf16.mxu0 %v804
    %1063 = vmatmul.mubr.bf16.gmra.mrb[0].mxu0 %v803
    %v1064 = vpop.f32.mrb[0].mxu0
    %v1065 = vadd.f32 0.0, %v1064
    %v1066 = vpop.f32.mrb[0].mxu0
    %v1067 = vpop.f32.mrb[0].mxu0
    %v1068 = vadd.f32 0.0, %v1067
    %v1069 = vpop.f32.mrb[0].mxu0
    %1070 = vdwg.mxu0
    %1071 = vmatprep.subr.bf16.mxu0 0
    %1072 = vmatpush1.bf16.msra.mxu0 %v930
    %1073 = vmatprep.subr.bf16.mxu0 0
    %1074 = vmatpush1.bf16.msra.mxu0 %v931
    %1075 = vmatprep.subr.bf16.mxu0 0
    %1076 = vmatpush1.bf16.msra.mxu0 0
    %1077 = vmatprep.subr.bf16.mxu0 0
    %1078 = vmatpush1.bf16.msra.mxu0 0
    %1079 = vmatprep.subr.bf16.mxu0 0
    %1080 = vmatpush1.bf16.msra.mxu0 0
    %1081 = vmatprep.subr.bf16.mxu0 0
    %1082 = vmatpush1.bf16.msra.mxu0 0
    %1083 = vmatprep.subr.bf16.mxu0 0
    %1084 = vmatpush1.bf16.msra.mxu0 0
    %1085 = vmatprep.subr.bf16.mxu0 0
    %1086 = vmatpush1.bf16.msra.mxu0 0
    %1087 = vmatprep.subr.bf16.mxu0 0
    %1088 = vmatpush1.bf16.msra.mxu0 0
    %1089 = vmatprep.subr.bf16.mxu0 0
    %1090 = vmatpush1.bf16.msra.mxu0 0
    %1091 = vmatprep.subr.bf16.mxu0 0
    %1092 = vmatpush1.bf16.msra.mxu0 0
    %1093 = vmatprep.subr.bf16.mxu0 0
    %1094 = vmatpush1.bf16.msra.mxu0 0
    %1095 = vmatprep.subr.bf16.mxu0 0
    %1096 = vmatpush1.bf16.msra.mxu0 0
    %1097 = vmatprep.subr.bf16.mxu0 0
    %1098 = vmatpush1.bf16.msra.mxu0 0
    %1099 = vmatprep.subr.bf16.mxu0 0
    %1100 = vmatpush1.bf16.msra.mxu0 0
    %1101 = vmatprep.subr.bf16.mxu0 0
    %1102 = vmatpush1.bf16.msra.mxu0 0
    %1103 = vmatprep.mubr.bf16.mxu0 0
    %1104 = vmatmul.mubr.bf16.gmra.mrb[0].mxu0 %v951
    %v1105 = vpop.f32.mrb[0].mxu0
    %v1106 = vadd.f32 %v1009, %v1105
    %v1107 = vpop.f32.mrb[0].mxu0
    %v1108 = vpop.f32.mrb[0].mxu0
    %v1109 = vadd.f32 %v1012, %v1108
    %v1110 = vpop.f32.mrb[0].mxu0
    %1111 = vmatprep.mubr.bf16.mxu0 0
    %1112 = vmatmul.mubr.bf16.gmra.mrb[0].mxu0 %v954
    %v1113 = vpop.f32.mrb[0].mxu0
    %v1114 = vadd.f32 %v1017, %v1113
    %v1115 = vpop.f32.mrb[0].mxu0
    %v1116 = vpop.f32.mrb[0].mxu0
    %v1117 = vadd.f32 %v1020, %v1116
    %v1118 = vpop.f32.mrb[0].mxu0
    %1119 = vmatprep.mubr.bf16.mxu0 0
    %1120 = vmatmul.mubr.bf16.gmra.mrb[0].mxu0 %v957
    %v1121 = vpop.f32.mrb[0].mxu0
    %v1122 = vadd.f32 %v1025, %v1121
    %v1123 = vpop.f32.mrb[0].mxu0
    %v1124 = vpop.f32.mrb[0].mxu0
    %v1125 = vadd.f32 %v1028, %v1124
    %v1126 = vpop.f32.mrb[0].mxu0
    %1127 = vmatprep.mubr.bf16.mxu0 0
    %1128 = vmatmul.mubr.bf16.gmra.mrb[0].mxu0 %v960
    %v1129 = vpop.f32.mrb[0].mxu0
    %v1130 = vadd.f32 %v1033, %v1129
    %v1131 = vpop.f32.mrb[0].mxu0
    %v1132 = vpop.f32.mrb[0].mxu0
    %v1133 = vadd.f32 %v1036, %v1132
    %v1134 = vpop.f32.mrb[0].mxu0
    %1135 = vmatprep.mubr.bf16.mxu0 0
    %1136 = vmatmul.mubr.bf16.gmra.mrb[0].mxu0 %v963
    %v1137 = vpop.f32.mrb[0].mxu0
    %v1138 = vadd.f32 %v1041, %v1137
    %v1139 = vpop.f32.mrb[0].mxu0
    %v1140 = vpop.f32.mrb[0].mxu0
    %v1141 = vadd.f32 %v1044, %v1140
    %v1142 = vpop.f32.mrb[0].mxu0
    %1143 = vmatprep.mubr.bf16.mxu0 0
    %1144 = vmatmul.mubr.bf16.gmra.mrb[0].mxu0 %v966
    %v1145 = vpop.f32.mrb[0].mxu0
    %v1146 = vadd.f32 %v1049, %v1145
    %v1147 = vpop.f32.mrb[0].mxu0
    %v1148 = vpop.f32.mrb[0].mxu0
    %v1149 = vadd.f32 %v1052, %v1148
    %v1150 = vpop.f32.mrb[0].mxu0
    %1151 = vmatprep.mubr.bf16.mxu0 0
    %1152 = vmatmul.mubr.bf16.gmra.mrb[0].mxu0 %v969
    %v1153 = vpop.f32.mrb[0].mxu0
    %v1154 = vadd.f32 %v1057, %v1153
    %v1155 = vpop.f32.mrb[0].mxu0
    %v1156 = vpop.f32.mrb[0].mxu0
    %v1157 = vadd.f32 %v1060, %v1156
    %v1158 = vpop.f32.mrb[0].mxu0
    %1159 = vmatprep.mubr.bf16.mxu0 0
    %1160 = vmatmul.mubr.bf16.gmra.mrb[0].mxu0 %v972
    %v1161 = vpop.f32.mrb[0].mxu0
    %v1162 = vadd.f32 %v1065, %v1161
    %v1163 = vpop.f32.mrb[0].mxu0
    %v1164 = vpop.f32.mrb[0].mxu0
    %v1165 = vadd.f32 %v1068, %v1164
    %v1166 = vpop.f32.mrb[0].mxu0
    %1167 = vdwg.mxu0
    %s1168 = smul.u32 0, 16
    %v1169 = vlaneseq
    %v1170 = vshrl.u32 %v1169, 7
    %v1171 = vadd.s32 %v1170, 8
    %v1172 = vstv %s1168
    %v1173 = vadd.s32 %v1172, %v1170
    %v1174 = vadd.s32 %v1172, %v1171
    %v1175 = vld [vmem:[#allocation2] sm:$0x1]
    %v1176 = vlaneseq
    %v1177 = vshrl.u32 %v1176, 7
    %v1178 = vsub.s32 0, %v1177
    %v1179 = vrot.slane %v1175, %v1178
    %vm1180 = vcmp.eq.s32.totalorder %v1173, %v1179
    %vm1181 = vcmp.eq.s32.totalorder %v1174, %v1179
    %v1182 = vsel %vm1180, 1, 0
    %v1183 = vsel %vm1181, 1, 0
    %v1184 = vcvt.s32.f32 %v1182
    %v1185 = vcvt.s32.f32 %v1183
    %v1186 = vpack.c.bf16 %v1185, %v1184
    %v1187 = vld [vmem:[#allocation8] sm:$0xff]
    %v1188 = vld [vmem:[#allocation8 + $0x8] sm:$0xff]
    %v1189 = vpack.c.bf16 %v1109, %v1106
    %v1190 = vpack.c.bf16 %v1117, %v1114
    %v1191 = vpack.c.bf16 %v1125, %v1122
    %v1192 = vpack.c.bf16 %v1133, %v1130
    %v1193 = vpack.c.bf16 %v1141, %v1138
    %v1194 = vpack.c.bf16 %v1149, %v1146
    %v1195 = vpack.c.bf16 %v1157, %v1154
    %v1196 = vpack.c.bf16 %v1165, %v1162
    %1197 = vmatprep.subr.bf16.mxu0 0
    %1198 = vmatpush1.bf16.msra.mxu0 %v1189
    %1199 = vmatprep.subr.bf16.mxu0 0
    %1200 = vmatpush1.bf16.msra.mxu0 %v1190
    %1201 = vmatprep.subr.bf16.mxu0 0
    %1202 = vmatpush1.bf16.msra.mxu0 %v1191
    %1203 = vmatprep.subr.bf16.mxu0 0
    %1204 = vmatpush1.bf16.msra.mxu0 %v1192
    %1205 = vmatprep.subr.bf16.mxu0 0
    %1206 = vmatpush1.bf16.msra.mxu0 %v1193
    %1207 = vmatprep.subr.bf16.mxu0 0
    %1208 = vmatpush1.bf16.msra.mxu0 %v1194
    %1209 = vmatprep.subr.bf16.mxu0 0
    %1210 = vmatpush1.bf16.msra.mxu0 %v1195
    %1211 = vmatprep.subr.bf16.mxu0 0
    %1212 = vmatpush1.bf16.msra.mxu0 %v1196
    %1213 = vmatprep.subr.bf16.mxu0 0
    %1214 = vmatpush1.bf16.msra.mxu0 0
    %1215 = vmatprep.subr.bf16.mxu0 0
    %1216 = vmatpush1.bf16.msra.mxu0 0
    %1217 = vmatprep.subr.bf16.mxu0 0
    %1218 = vmatpush1.bf16.msra.mxu0 0
    %1219 = vmatprep.subr.bf16.mxu0 0
    %1220 = vmatpush1.bf16.msra.mxu0 0
    %1221 = vmatprep.subr.bf16.mxu0 0
    %1222 = vmatpush1.bf16.msra.mxu0 0
    %1223 = vmatprep.subr.bf16.mxu0 0
    %1224 = vmatpush1.bf16.msra.mxu0 0
    %1225 = vmatprep.subr.bf16.mxu0 0
    %1226 = vmatpush1.bf16.msra.mxu0 0
    %1227 = vmatprep.subr.bf16.mxu0 0
    %1228 = vmatpush1.bf16.msra.mxu0 0
    %1229 = vmatprep.mubr.bf16.mxu0 0
    %1230 = vmatmul.mubr.bf16.gmra.mrb[0].mxu0 %v1186
    %v1231 = vpop.f32.mrb[0].mxu0
    %v1232 = vadd.f32 0.0, %v1231
    %v1233 = vpop.f32.mrb[0].mxu0
    %v1234 = vpop.f32.mrb[0].mxu0
    %v1235 = vadd.f32 0.0, %v1234
    %v1236 = vpop.f32.mrb[0].mxu0
    %1237 = vdwg.mxu0
    %v1238 = vadd.f32 %v1187, %v1232
    %v1239 = vadd.f32 %v1188, %v1235
    %1240 = vst [vmem:[#allocation8] sm:$0xff] %v1238
    %1241 = vst [vmem:[#allocation8 + $0x8] sm:$0xff] %v1239
    // Predicated region
    $region58: #{tpu_custom_call.1} parent=1 // pred_check
      %p1242 = pneg %p76
    $region59: #{tpu_custom_call.1} parent=1 // pred_check_branch
      %1244 = sbr.rel (%p1242) target = $region61
    $region60: #{tpu_custom_call.1} parent=1 // pred_region
      %v1245 = vld [vmem:[#allocation8] sm:$0xff]
      %v1246 = vld [vmem:[#allocation8 + $0x8] sm:$0xff]
      %v1247 = vld [vmem:[%s7] sm:$0xff]
      %v1248 = vld [vmem:[%s7 + $0x8] sm:$0xff]
      %1250 = vset.pattern.permute.xlu0 0
      %1251 = vperm.xlu0 %1250, %v1247
      %v1252 = vpop.permute.xlu0 %1251
      %1255 = vset.pattern.permute.xlu0 0
      %1256 = vperm.xlu0 %1255, %v1248
      %v1257 = vpop.permute.xlu0 %1256
      %v1259 = vmul.f32 %v1245, %v1252
      %v1260 = vmul.f32 %v1246, %v1257
      %v1261 = vld [vmem:[#allocation7] sm:$0xf]
      %v1262 = vld [vmem:[#allocation7 + $0x4] sm:$0xf]
      %v1263 = vld [vmem:[%s8] sm:$0xf]
      %v1264 = vld [vmem:[%s8 + $0x4] sm:$0xf]
      %v1265 = vld [vmem:[%s8 + $0x8] sm:$0xf]
      %v1266 = vld [vmem:[%s8 + $0xc] sm:$0xf]
      %v1269 = vunpack.c.l.b16 %v1261
      %v1270 = vunpack.c.l.b16 %v1262
      %v1271 = vpack.c.b16 %v1270, %v1269
      %v1276 = vunpack.c.l.b16 %v1263
      %v1277 = vunpack.c.l.b16 %v1264
      %v1278 = vunpack.c.l.b16 %v1265
      %v1279 = vunpack.c.l.b16 %v1266
      %v1280 = vpack.c.b16 %v1277, %v1276
      %v1281 = vpack.c.b16 %v1279, %v1278
      %v1285 = vsel %vm499, %v1271, 0
      %1287 = vmatprep.subr.bf16.mxu0 0
      %1288 = vmatpush1.bf16.msra.mxu0 %v1280
      %1289 = vmatprep.subr.bf16.mxu0 0
      %1290 = vmatpush1.bf16.msra.mxu0 %v1281
      %1291 = vmatprep.subr.bf16.mxu0 0
      %1292 = vmatpush1.bf16.msra.mxu0 0
      %1293 = vmatprep.subr.bf16.mxu0 0
      %1294 = vmatpush1.bf16.msra.mxu0 0
      %1295 = vmatprep.subr.bf16.mxu0 0
      %1296 = vmatpush1.bf16.msra.mxu0 0
      %1297 = vmatprep.subr.bf16.mxu0 0
      %1298 = vmatpush1.bf16.msra.mxu0 0
      %1299 = vmatprep.subr.bf16.mxu0 0
      %1300 = vmatpush1.bf16.msra.mxu0 0
      %1301 = vmatprep.subr.bf16.mxu0 0
      %1302 = vmatpush1.bf16.msra.mxu0 0
      %1303 = vmatprep.subr.bf16.mxu0 0
      %1304 = vmatpush1.bf16.msra.mxu0 0
      %1305 = vmatprep.subr.bf16.mxu0 0
      %1306 = vmatpush1.bf16.msra.mxu0 0
      %1307 = vmatprep.subr.bf16.mxu0 0
      %1308 = vmatpush1.bf16.msra.mxu0 0
      %1309 = vmatprep.subr.bf16.mxu0 0
      %1310 = vmatpush1.bf16.msra.mxu0 0
      %1311 = vmatprep.subr.bf16.mxu0 0
      %1312 = vmatpush1.bf16.msra.mxu0 0
      %1313 = vmatprep.subr.bf16.mxu0 0
      %1314 = vmatpush1.bf16.msra.mxu0 0
      %1315 = vmatprep.subr.bf16.mxu0 0
      %1316 = vmatpush1.bf16.msra.mxu0 0
      %1317 = vmatprep.subr.bf16.mxu0 0
      %1318 = vmatpush1.bf16.msra.mxu0 0
      %1319 = vmatprep.mubr.bf16.mxu0 0
      %1320 = vmatmul.mubr.bf16.gmra.mrb[0].mxu0 %v1285
      %v1321 = vpop.f32.mrb[0].mxu0
      %v1322 = vadd.f32 0.0, %v1321
      %v1323 = vpop.f32.mrb[0].mxu0
      %v1324 = vpop.f32.mrb[0].mxu0
      %v1325 = vadd.f32 0.0, %v1324
      %v1326 = vpop.f32.mrb[0].mxu0
      %1327 = vdwg.mxu0
      %v1328 = vadd.f32 %v1259, %v1322
      %v1329 = vadd.f32 %v1260, %v1325
      %v1330 = vld [vmem:[%s9] sm:$0x1]
      %v1332 = vlaneseq
      %v1333 = vshrl.u32 %v1332, 7
      %v1334 = vsub.s32 0, %v1333
      %v1335 = vrot.slane %v1330, %v1334
      %v1337 = vadd.f32 %v1328, %v1335
      %v1338 = vadd.f32 %v1329, %v1335
      %1339 = vst [vmem:[#allocation8] sm:$0xff] %v1337
      %1340 = vst [vmem:[#allocation8 + $0x8] sm:$0xff] %v1338
    $region61: #{tpu_custom_call.1} parent=1 // pred_fallthru
      _
    // Predicated region
    $region62: #{tpu_custom_call.1} parent=1 // pred_check
      _
    $region63: #{tpu_custom_call.1} parent=1 // pred_check_branch
      %1342 = sbr.rel (0) target = $region65
    $region64: #{tpu_custom_call.1} parent=1 // pred_region
      %s1344 = ssub.s32 256, 256
      %1345 = vsyncadd [#allocation4], %s1344
      %s1346 = sshll.u32 [#allocation8], 4
      %s1347 = int_to_ptr.vmem [resolvable:$true] %s1346
      %1352 = dma.vmem_to_hbm [thread:$0]  %s1347, 256, %s10, [#allocation4], 128, 128, 8
    $region65: #{tpu_custom_call.1} parent=1 // pred_fallthru
      _
    // Predicated region
    $region66: #{tpu_custom_call.1} parent=1 // pred_check
      _
    $region67: #{tpu_custom_call.1} parent=1 // pred_check_branch
      %1354 = sbr.rel (0) target = $region69
    $region68: #{tpu_custom_call.1} parent=1 // pred_region
      %1355 = dma.done [#allocation4], 256
    $region69: #{tpu_custom_call.1} parent=1 // pred_fallthru
      _
    %1356 = vsyncpa [#allocation3], 1
    %1357 = vsyncpa [#allocation6], 1
    %1358 = vsyncpa [#allocation4], 1

</llo_original>
